<compile_context>
chip_gen: v7x
topology: tpu7x:2x2x1
jax: 0.10.0
libtpu: 0.0.40
codegen_flags: <defaults>
</compile_context>

<pallas_src>
import jax
import jax.numpy as jnp
import numpy as np
from jax import lax
from jax.experimental import pallas as pl
from jax.experimental.pallas import tpu as pltpu


def _make_kernel(lag, n_layers):
    def kernel(x_ref, halo_ref, *rest):
        out_ref = rest[-1]
        params = rest[:-1]
        assert len(params) == 2 * n_layers

        x = x_ref[0]        # (1, TILE_T)  time on lanes
        h = halo_ref[0]     # (1, HALO)    next HALO time steps (halo)
        tile = x.shape[-1]
        xcat = jnp.concatenate([x, h], axis=-1)                    # (1, TILE_T + HALO)

        # In-kernel im2col: row l is X shifted left by l (static lane slices, XLU work).
        patches = jnp.concatenate(
            [xcat[:, l:l + tile] for l in range(lag)], axis=0)     # (lag, TILE_T)

        # Layer 0: (H0, lag) @ (lag, TILE_T) -> f32 (H0, TILE_T)
        acc = jnp.dot(params[0][...], patches,
                      preferred_element_type=jnp.float32,
                      precision=lax.Precision.HIGHEST) + params[1][...]
        # Remaining 1x1 conv layers: act -> (d_out, d_in) @ (d_in, TILE_T)
        for i in range(1, n_layers):
            # TODO(synk): activation_helper(activation) — only ReLU implemented here.
            acc = jnp.maximum(acc, 0.0)
            acc = jnp.dot(params[2 * i][...], acc,
                          preferred_element_type=jnp.float32,
                          precision=lax.Precision.HIGHEST) + params[2 * i + 1][...]

        out_ref[0] = acc.astype(out_ref.dtype)                     # (C_out, TILE_T)

    return kernel


def decoder_rec_uni_forward(X, conv_weights, conv_biases, lag, *,
                            tile_t=2048, compute_dtype=jnp.float32):
    """X: (batch, T, 1).  conv_weights[i]: (d_out, d_in, k_i) in torch Conv1d layout
    (k_0 = lag, k_i = 1 for i > 0).  conv_biases[i]: (d_out,).
    Returns (batch, T - lag + 1, 1, C_out), matching the PyTorch module."""
    batch, T, c_in = X.shape
    assert c_in == 1
    T_out = T - lag + 1
    assert T_out >= 1
    n_layers = len(conv_weights)
    c_out = conv_weights[-1].shape[0]

    # Halo: smallest 128-lane multiple that covers the lag-1 overhang.
    halo = max(128, pl.cdiv(max(lag - 1, 1), 128) * 128)

    # Time tile: multiple of the halo (hence of 128 lanes), no larger than the
    # (halo-rounded) output length.  All blocks here are tiny, so this also fits
    # comfortably inside v7x's smaller VMEM.
    tile_t = max(halo, (int(tile_t) // halo) * halo)
    tile_t = min(tile_t, pl.cdiv(T_out, halo) * halo)
    T_out_pad = pl.cdiv(T_out, tile_t) * tile_t
    nt = T_out_pad // tile_t
    T_pad = T_out_pad + halo     # the last halo block ends exactly at T_pad

    # (batch, T, 1) -> (batch, 1, T_pad), zero-padded in time.
    x2 = X[:, :, 0].astype(compute_dtype)
    x3 = jnp.pad(x2, ((0, 0), (0, T_pad - T)))[:, None, :]

    # Torch Conv1d weights -> (d_out, d_in*k) matmul weights; biases -> (d_out, 1).
    kern_ws, kern_bs = [], []
    for i, (w, b) in enumerate(zip(conv_weights, conv_biases)):
        if i == 0:
            wm = w[:, 0, :].astype(compute_dtype)          # (H0, lag)
        else:
            wm = w[:, :, 0].astype(jnp.float32)            # (d_out, d_in)
        kern_ws.append(wm)
        kern_bs.append(b.reshape(-1, 1).astype(jnp.float32))

    halo_blocks_per_tile = tile_t // halo
    in_specs = [
        pl.BlockSpec((1, 1, tile_t), lambda b, t: (b, 0, t)),
        pl.BlockSpec((1, 1, halo),
                     lambda b, t: (b, 0, (t + 1) * halo_blocks_per_tile)),
    ]
    args = [x3, x3]
    for w, b in zip(kern_ws, kern_bs):
        in_specs.append(pl.BlockSpec(w.shape, lambda b_, t_: (0, 0)))
        args.append(w)
        in_specs.append(pl.BlockSpec(b.shape, lambda b_, t_: (0, 0)))
        args.append(b)

    out = pl.pallas_call(
        _make_kernel(lag, n_layers),
        out_shape=jax.ShapeDtypeStruct((batch, c_out, T_out_pad), jnp.float32),
        grid=(batch, nt),
        in_specs=in_specs,
        out_specs=pl.BlockSpec((1, c_out, tile_t), lambda b, t: (b, 0, t)),
        compiler_params=pltpu.CompilerParams(
            dimension_semantics=("parallel", "parallel"),
            vmem_limit_bytes=32 * 1024 * 1024),
    )(*args)

    # (batch, C_out, T_out_pad) -> (batch, T_out, 1, C_out): same as torch
    # `conv_out.transpose(2, 1).unsqueeze(-2)`; touches only batch*T_out*C_out elems.
    return jnp.swapaxes(out[:, :, :T_out], 1, 2)[:, :, None, :]


def init_params(key, lag, hidden):
    """Deterministic synthetic params in the PyTorch Conv1d layout."""
    d_ins = [1] + list(hidden)
    d_outs = list(hidden) + [2]
    ws, bs = [], []
    for i, (d_in, d_out) in enumerate(zip(d_ins, d_outs)):
        k = lag if i == 0 else 1
        key, k1, k2 = jax.random.split(key, 3)
        ws.append(jax.random.uniform(k1, (d_out, d_in, k), jnp.float32, -0.3, 0.3))
        bs.append(jax.random.uniform(k2, (d_out,), jnp.float32, -0.3, 0.3))
    return ws, bs


def reference_forward(X, conv_w, conv_b, lag):
    """Pure-JAX replica of the PyTorch forward (Conv1d cross-correlation, ReLU)."""
    batch, T, _ = X.shape
    T_out = T - lag + 1
    x = X[:, :, 0]
    patches = jnp.stack([x[:, l:l + T_out] for l in range(lag)], axis=-1)  # (b,T_out,lag)
    h = jnp.einsum('btl,hl->bth', patches, conv_w[0][:, 0, :],
                   precision=lax.Precision.HIGHEST) + conv_b[0]
    for i in range(1, len(conv_w)):
        h = jnp.maximum(h, 0.0)
        h = jnp.einsum('btc,oc->bto', h, conv_w[i][:, :, 0],
                       precision=lax.Precision.HIGHEST) + conv_b[i]
    return h[:, :, None, :]                                                # (b,T_out,1,2)


if __name__ == "__main__":
    batch, T, lag = 2, 16, 3
    hidden = [32, 16]

    key = jax.random.PRNGKey(0)
    key, kx = jax.random.split(key)
    X = jax.random.normal(kx, (batch, T, 1), jnp.float32)

    ws, bs = init_params(key, lag, hidden)

    out = decoder_rec_uni_forward(X, ws, bs, lag)
    out = jax.block_until_ready(out)

    ref = reference_forward(X, ws, bs, lag)
    np.testing.assert_allclose(np.asarray(out), np.asarray(ref), rtol=1e-4, atol=1e-4)
    assert out.shape == (batch, T - lag + 1, 1, 2)

    print("KERNEL_OK")
</pallas_src>

<mosaic_0001>
module attributes {stable_mosaic.version = 11 : i64} {
  func.func @kernel(%arg0: i32, %arg1: i32, %arg2: memref<1x1x128xf32, #tpu.memory_space<vmem>>, %arg3: memref<1x1x128xf32, #tpu.memory_space<vmem>>, %arg4: memref<32x3xf32, #tpu.memory_space<vmem>>, %arg5: memref<32x1xf32, #tpu.memory_space<vmem>>, %arg6: memref<16x32xf32, #tpu.memory_space<vmem>>, %arg7: memref<16x1xf32, #tpu.memory_space<vmem>>, %arg8: memref<2x16xf32, #tpu.memory_space<vmem>>, %arg9: memref<2x1xf32, #tpu.memory_space<vmem>>, %arg10: memref<1x2x128xf32, #tpu.memory_space<vmem>>) attributes {dimension_semantics = [#tpu.dimension_semantics<parallel>, #tpu.dimension_semantics<parallel>], iteration_bounds = array<i64: 2, 1>, scalar_prefetch = 0 : i64, scratch_operands = 0 : i64, tpu.core_type = #tpu.core_type<tc>, window_params = [{transform_indices = @transform_0, window_bounds = array<i64: 1, 1, 128>}, {transform_indices = @transform_1, window_bounds = array<i64: 1, 1, 128>}, {pipeline_mode = #tpu.pipeline_mode<synchronous>, transform_indices = @transform_2, window_bounds = array<i64: 32, 3>}, {pipeline_mode = #tpu.pipeline_mode<synchronous>, transform_indices = @transform_3, window_bounds = array<i64: 32, 1>}, {pipeline_mode = #tpu.pipeline_mode<synchronous>, transform_indices = @transform_4, window_bounds = array<i64: 16, 32>}, {pipeline_mode = #tpu.pipeline_mode<synchronous>, transform_indices = @transform_5, window_bounds = array<i64: 16, 1>}, {pipeline_mode = #tpu.pipeline_mode<synchronous>, transform_indices = @transform_6, window_bounds = array<i64: 2, 16>}, {pipeline_mode = #tpu.pipeline_mode<synchronous>, transform_indices = @transform_7, window_bounds = array<i64: 2, 1>}, {transform_indices = @transform_8, window_bounds = array<i64: 1, 2, 128>}]} {
    %c0 = arith.constant 0 : index
    %c0_0 = arith.constant 0 : index
    %c0_1 = arith.constant 0 : index
    %0 = vector.load %arg2[%c0, %c0_0, %c0_1] : memref<1x1x128xf32, #tpu.memory_space<vmem>>, vector<1x1x128xf32>
    %1 = vector.shape_cast %0 : vector<1x1x128xf32> to vector<1x128xf32>
    %c0_2 = arith.constant 0 : index
    %c0_3 = arith.constant 0 : index
    %c0_4 = arith.constant 0 : index
    %2 = vector.load %arg3[%c0_2, %c0_3, %c0_4] : memref<1x1x128xf32, #tpu.memory_space<vmem>>, vector<1x1x128xf32>
    %3 = vector.shape_cast %2 : vector<1x1x128xf32> to vector<1x128xf32>
    %4 = tpu.concatenate %1, %3 in 1 : vector<1x128xf32>, vector<1x128xf32> -> vector<1x256xf32>
    %5 = vector.extract_strided_slice %4 {offsets = [0, 0], sizes = [1, 128], strides = [1, 1]} : vector<1x256xf32> to vector<1x128xf32>
    %6 = vector.extract_strided_slice %4 {offsets = [0, 1], sizes = [1, 128], strides = [1, 1]} : vector<1x256xf32> to vector<1x128xf32>
    %7 = vector.extract_strided_slice %4 {offsets = [0, 2], sizes = [1, 128], strides = [1, 1]} : vector<1x256xf32> to vector<1x128xf32>
    %8 = tpu.concatenate %5, %6, %7 in 0 : vector<1x128xf32>, vector<1x128xf32>, vector<1x128xf32> -> vector<3x128xf32>
    %c0_5 = arith.constant 0 : index
    %c0_6 = arith.constant 0 : index
    %9 = vector.load %arg4[%c0_5, %c0_6] : memref<32x3xf32, #tpu.memory_space<vmem>>, vector<32x3xf32>
    %cst = arith.constant dense<0.000000e+00> : vector<32x128xf32>
    %10 = tpu.matmul %9, %8, %cst {dimension_numbers = #tpu.dot_dimension_numbers<[1], [0], [0], [1], [0, 0, 1, 1], [], []>, precision = #tpu.contract_precision<fp32>} : vector<32x3xf32>, vector<3x128xf32>, vector<32x128xf32> -> vector<32x128xf32>
    %c0_7 = arith.constant 0 : index
    %c0_8 = arith.constant 0 : index
    %11 = vector.load %arg5[%c0_7, %c0_8] : memref<32x1xf32, #tpu.memory_space<vmem>>, vector<32x1xf32>
    %12 = vector.broadcast %11 : vector<32x1xf32> to vector<32x128xf32>
    %13 = arith.addf %10, %12 : vector<32x128xf32>
    %cst_9 = arith.constant 0.000000e+00 : f32
    %14 = vector.broadcast %cst_9 : f32 to vector<32x128xf32>
    %15 = arith.maximumf %13, %14 : vector<32x128xf32>
    %c0_10 = arith.constant 0 : index
    %c0_11 = arith.constant 0 : index
    %16 = vector.load %arg6[%c0_10, %c0_11] : memref<16x32xf32, #tpu.memory_space<vmem>>, vector<16x32xf32>
    %cst_12 = arith.constant dense<0.000000e+00> : vector<16x128xf32>
    %17 = tpu.matmul %16, %15, %cst_12 {dimension_numbers = #tpu.dot_dimension_numbers<[1], [0], [0], [1], [0, 0, 1, 1], [], []>, precision = #tpu.contract_precision<fp32>} : vector<16x32xf32>, vector<32x128xf32>, vector<16x128xf32> -> vector<16x128xf32>
    %c0_13 = arith.constant 0 : index
    %c0_14 = arith.constant 0 : index
    %18 = vector.load %arg7[%c0_13, %c0_14] : memref<16x1xf32, #tpu.memory_space<vmem>>, vector<16x1xf32>
    %19 = vector.broadcast %18 : vector<16x1xf32> to vector<16x128xf32>
    %20 = arith.addf %17, %19 : vector<16x128xf32>
    %cst_15 = arith.constant 0.000000e+00 : f32
    %21 = vector.broadcast %cst_15 : f32 to vector<16x128xf32>
    %22 = arith.maximumf %20, %21 : vector<16x128xf32>
    %c0_16 = arith.constant 0 : index
    %c0_17 = arith.constant 0 : index
    %23 = vector.load %arg8[%c0_16, %c0_17] : memref<2x16xf32, #tpu.memory_space<vmem>>, vector<2x16xf32>
    %cst_18 = arith.constant dense<0.000000e+00> : vector<2x128xf32>
    %24 = tpu.matmul %23, %22, %cst_18 {dimension_numbers = #tpu.dot_dimension_numbers<[1], [0], [0], [1], [0, 0, 1, 1], [], []>, precision = #tpu.contract_precision<fp32>} : vector<2x16xf32>, vector<16x128xf32>, vector<2x128xf32> -> vector<2x128xf32>
    %c0_19 = arith.constant 0 : index
    %c0_20 = arith.constant 0 : index
    %25 = vector.load %arg9[%c0_19, %c0_20] : memref<2x1xf32, #tpu.memory_space<vmem>>, vector<2x1xf32>
    %26 = vector.broadcast %25 : vector<2x1xf32> to vector<2x128xf32>
    %27 = arith.addf %24, %26 : vector<2x128xf32>
    %c0_21 = arith.constant 0 : index
    %c0_22 = arith.constant 0 : index
    %c0_23 = arith.constant 0 : index
    %28 = vector.load %arg10[%c0_21, %c0_22, %c0_23] : memref<1x2x128xf32, #tpu.memory_space<vmem>>, vector<1x2x128xf32>
    %29 = vector.shape_cast %28 : vector<1x2x128xf32> to vector<2x128xf32>
    %30 = vector.shape_cast %27 : vector<2x128xf32> to vector<1x2x128xf32>
    tpu.vector_store %arg10[%c0_21, %c0_22, %c0_23], %30 {strides = array<i32>} : memref<1x2x128xf32, #tpu.memory_space<vmem>>, vector<1x2x128xf32>,
    return
  }
  func.func @transform_0(%arg0: i32, %arg1: i32) -> (i32, i32, i32) {
    %c0_i32 = arith.constant 0 : i32
    %c0_i32_0 = arith.constant 0 : i32
    return %arg0, %c0_i32, %arg1 : i32, i32, i32
  }
  func.func @transform_1(%arg0: i32, %arg1: i32) -> (i32, i32, i32) {
    %c1_i32 = arith.constant 1 : i32
    %0 = arith.addi %arg1, %c1_i32 : i32
    %c1_i32_0 = arith.constant 1 : i32
    %1 = arith.muli %0, %c1_i32_0 : i32
    %c0_i32 = arith.constant 0 : i32
    %c0_i32_1 = arith.constant 0 : i32
    return %arg0, %c0_i32, %1 : i32, i32, i32
  }
  func.func @transform_2(%arg0: i32, %arg1: i32) -> (i32, i32) {
    %c0_i32 = arith.constant 0 : i32
    %c0_i32_0 = arith.constant 0 : i32
    %c0_i32_1 = arith.constant 0 : i32
    return %c0_i32, %c0_i32_0 : i32, i32
  }
  func.func @transform_3(%arg0: i32, %arg1: i32) -> (i32, i32) {
    %c0_i32 = arith.constant 0 : i32
    %c0_i32_0 = arith.constant 0 : i32
    %c0_i32_1 = arith.constant 0 : i32
    return %c0_i32, %c0_i32_0 : i32, i32
  }
  func.func @transform_4(%arg0: i32, %arg1: i32) -> (i32, i32) {
    %c0_i32 = arith.constant 0 : i32
    %c0_i32_0 = arith.constant 0 : i32
    %c0_i32_1 = arith.constant 0 : i32
    return %c0_i32, %c0_i32_0 : i32, i32
  }
  func.func @transform_5(%arg0: i32, %arg1: i32) -> (i32, i32) {
    %c0_i32 = arith.constant 0 : i32
    %c0_i32_0 = arith.constant 0 : i32
    %c0_i32_1 = arith.constant 0 : i32
    return %c0_i32, %c0_i32_0 : i32, i32
  }
  func.func @transform_6(%arg0: i32, %arg1: i32) -> (i32, i32) {
    %c0_i32 = arith.constant 0 : i32
    %c0_i32_0 = arith.constant 0 : i32
    %c0_i32_1 = arith.constant 0 : i32
    return %c0_i32, %c0_i32_0 : i32, i32
  }
  func.func @transform_7(%arg0: i32, %arg1: i32) -> (i32, i32) {
    %c0_i32 = arith.constant 0 : i32
    %c0_i32_0 = arith.constant 0 : i32
    %c0_i32_1 = arith.constant 0 : i32
    return %c0_i32, %c0_i32_0 : i32, i32
  }
  func.func @transform_8(%arg0: i32, %arg1: i32) -> (i32, i32, i32) {
    %c0_i32 = arith.constant 0 : i32
    %c0_i32_0 = arith.constant 0 : i32
    return %arg0, %c0_i32, %arg1 : i32, i32, i32
  }
}

</mosaic_0001>

<llo_original>
// kernel: tpu_custom_call.1
$region0: #{tpu_custom_call.1}
  #allocation0 [shape = 'u32[]', space=smem, size = 0x4, offset = 0x4, fixed_abs, tag = 'smem constant byte address 0x4 - core index']
  #allocation1 [shape = 'u32[144,128]{1,0:T(1,128)}', space=vmem, size = 0x12000, scoped, tag = 'internal scratch']
  %s0 = inlined_call_operand.vmem [shape: f32[2,1,256], index: 0, kind: input, shape index: {}]
  %s1 = inlined_call_operand.vmem [shape: f32[2,1,256], index: 1, kind: input, shape index: {}]
  %s2 = inlined_call_operand.vmem [shape: f32[32,3], index: 2, kind: input, shape index: {}]
  %s3 = inlined_call_operand.vmem [shape: f32[32,1], index: 3, kind: input, shape index: {}]
  %s4 = inlined_call_operand.vmem [shape: f32[16,32], index: 4, kind: input, shape index: {}]
  %s5 = inlined_call_operand.vmem [shape: f32[16,1], index: 5, kind: input, shape index: {}]
  %s6 = inlined_call_operand.vmem [shape: f32[2,16], index: 6, kind: input, shape index: {}]
  %s7 = inlined_call_operand.vmem [shape: f32[2,1], index: 7, kind: input, shape index: {}]
  %s8 = inlined_call_operand.hbm [shape: f32[2,2,128], index: 8, kind: output, shape index: {}]
  %s9 = sld [smem:[#allocation0]]
  $region65: #{tpu_custom_call.1} parent=0
    _
  %s11 = ssub.s32 1, %s9
  %s12 = scalar_select 0, %s11, %s9
  $region1: #{tpu_custom_call.1} parent=0
    #allocation2 [shape = 'u8[2048]{0}', space=vmem, size = 0x800, scoped, tag = 'output window, operand 0']
    #allocation3 [shape = 's32[2]{0}', space=sflag, size = 0x8, scoped, tag = 'scoped memory for tpu_custom_call.1']
    %13 = vsyncpa [#allocation3], 0
    %s14 = scalar_lea.sflag [#allocation3], 1
    %15 = vsyncpa %s14, 0
    loop: start=0, step=1, limit=4
    $region2: #{tpu_custom_call.1} parent=1 // loop_pre_header
      _
    $region3: #{tpu_custom_call.1} parent=1 // loop_header
      %s17 = sphi 0, %s21
      %p18 = scmp.ge.s32.totalorder %s17, 4
      %s24 = sphi 0, %s36
      %s25 = sphi 0, %s32
      %s26 = sphi 0, %s24
      %s27 = sphi 0, %s25
      %s28 = sphi 0, %s26
      %s29 = sphi 0, %s27
      %s41 = sphi 0, %s43
      %s44 = sphi 0, %s41
      %s45 = sphi 0, %s44
      %s61 = sphi 0, %s45
      %s71 = sphi 0, %s73
      %s74 = sphi 0, %s71
      %s75 = sphi 0, %s74
      %s91 = sphi 0, %s75
      %s95 = sphi 0, %s95
      %s97 = sphi 0, %s95
      %s98 = sphi 0, %s97
      %s112 = sphi 0, %s98
      %s116 = sphi 0, %s116
      %s118 = sphi 0, %s116
      %s119 = sphi 0, %s118
      %s133 = sphi 0, %s119
      %s137 = sphi 0, %s137
      %s139 = sphi 0, %s137
      %s140 = sphi 0, %s139
      %s154 = sphi 0, %s140
      %s158 = sphi 0, %s158
      %s160 = sphi 0, %s158
      %s161 = sphi 0, %s160
      %s175 = sphi 0, %s161
      %s179 = sphi 0, %s179
      %s181 = sphi 0, %s179
      %s182 = sphi 0, %s181
      %s196 = sphi 0, %s182
      %s200 = sphi 0, %s200
      %s202 = sphi 0, %s200
      %s203 = sphi 0, %s202
      %s217 = sphi 0, %s203
      %s225 = sphi 0, %s227
      %s228 = sphi 0, %s225
      %s229 = sphi 0, %s228
      %s245 = sphi 0, %s229
    $region4: #{tpu_custom_call.1} parent=1 // loop_header_branch
      %20 = sbr.rel (%p18) target = $region8
    $region5: #{tpu_custom_call.1} parent=1 // loop_body
      %s22 = ssub.s32 %s17, 1
      %s23 = ssub.s32 %s17, 2
      %s30 = sadd.s32 1, %s25
      %p31 = scmp.ge.s32.totalorder %s30, 1
      %s32 = scalar_select %p31, 0, %s30
      %s33 = sadd.s32 1, %s24
      %s34 = scalar_select %p31, %s33, %s24
      %p35 = scmp.ge.s32.totalorder %s34, 2
      %s36 = scalar_select %p35, 0, %s34
      %s37 = ssub.s32 %s24, %s36
      %s38 = ssub.s32 %s25, %s32
      %s39 = sor.u32 %s37, %s38
      %p40 = scmp.eq.s32.totalorder %s39, 0
      %s42 = sadd.s32 %s41, 1
      %s43 = scalar_select %p40, %s41, %s42
      %p46 = pneg %p40
      %p47 = scmp.eq.s32.totalorder %s17, 1
      %p48 = por %p46, %p47
      %p49 = scmp.ne.s32.totalorder %s41, %s44
      %p50 = scmp.eq.s32.totalorder %s17, 0
      %p51 = por %p49, %p50
      %p52 = scmp.ne.s32.totalorder %s41, %s44
      %p53 = scmp.eq.s32.totalorder %s22, 1
      %p54 = por %p52, %p53
      %p55 = scmp.ne.s32.totalorder %s44, %s45
      %p56 = scmp.eq.s32.totalorder %s22, 0
      %p57 = por %p55, %p56
      %p58 = scmp.ne.s32.totalorder %s44, %s45
      %p59 = scmp.eq.s32.totalorder %s23, 1
      %p60 = por %p58, %p59
      %p62 = scmp.ne.s32.totalorder %s45, %s61
      %p63 = scmp.eq.s32.totalorder %s23, 0
      %p64 = por %p62, %p63
      %s65 = sadd.s32 %s25, 1
      %s66 = sadd.s32 %s32, 1
      %s67 = ssub.s32 %s24, %s36
      %s68 = ssub.s32 %s65, %s66
      %s69 = sor.u32 %s67, %s68
      %p70 = scmp.eq.s32.totalorder %s69, 0
      %s72 = sadd.s32 %s71, 1
      %s73 = scalar_select %p70, %s71, %s72
      %p76 = pneg %p70
      %p77 = scmp.eq.s32.totalorder %s17, 1
      %p78 = por %p76, %p77
      %p79 = scmp.ne.s32.totalorder %s71, %s74
      %p80 = scmp.eq.s32.totalorder %s17, 0
      %p81 = por %p79, %p80
      %p82 = scmp.ne.s32.totalorder %s71, %s74
      %p83 = scmp.eq.s32.totalorder %s22, 1
      %p84 = por %p82, %p83
      %p85 = scmp.ne.s32.totalorder %s74, %s75
      %p86 = scmp.eq.s32.totalorder %s22, 0
      %p87 = por %p85, %p86
      %p88 = scmp.ne.s32.totalorder %s74, %s75
      %p89 = scmp.eq.s32.totalorder %s23, 1
      %p90 = por %p88, %p89
      %p92 = scmp.ne.s32.totalorder %s75, %s91
      %p93 = scmp.eq.s32.totalorder %s23, 0
      %p94 = por %p92, %p93
      %s96 = sadd.s32 %s95, 1
      %p99 = scmp.eq.s32.totalorder %s17, 1
      %p100 = scmp.ne.s32.totalorder %s95, %s97
      %p101 = scmp.eq.s32.totalorder %s17, 0
      %p102 = por %p100, %p101
      %p103 = scmp.ne.s32.totalorder %s95, %s97
      %p104 = scmp.eq.s32.totalorder %s22, 1
      %p105 = por %p103, %p104
      %p106 = scmp.ne.s32.totalorder %s97, %s98
      %p107 = scmp.eq.s32.totalorder %s22, 0
      %p108 = por %p106, %p107
      %p109 = scmp.ne.s32.totalorder %s97, %s98
      %p110 = scmp.eq.s32.totalorder %s23, 1
      %p111 = por %p109, %p110
      %p113 = scmp.ne.s32.totalorder %s98, %s112
      %p114 = scmp.eq.s32.totalorder %s23, 0
      %p115 = por %p113, %p114
      %s117 = sadd.s32 %s116, 1
      %p120 = scmp.eq.s32.totalorder %s17, 1
      %p121 = scmp.ne.s32.totalorder %s116, %s118
      %p122 = scmp.eq.s32.totalorder %s17, 0
      %p123 = por %p121, %p122
      %p124 = scmp.ne.s32.totalorder %s116, %s118
      %p125 = scmp.eq.s32.totalorder %s22, 1
      %p126 = por %p124, %p125
      %p127 = scmp.ne.s32.totalorder %s118, %s119
      %p128 = scmp.eq.s32.totalorder %s22, 0
      %p129 = por %p127, %p128
      %p130 = scmp.ne.s32.totalorder %s118, %s119
      %p131 = scmp.eq.s32.totalorder %s23, 1
      %p132 = por %p130, %p131
      %p134 = scmp.ne.s32.totalorder %s119, %s133
      %p135 = scmp.eq.s32.totalorder %s23, 0
      %p136 = por %p134, %p135
      %s138 = sadd.s32 %s137, 1
      %p141 = scmp.eq.s32.totalorder %s17, 1
      %p142 = scmp.ne.s32.totalorder %s137, %s139
      %p143 = scmp.eq.s32.totalorder %s17, 0
      %p144 = por %p142, %p143
      %p145 = scmp.ne.s32.totalorder %s137, %s139
      %p146 = scmp.eq.s32.totalorder %s22, 1
      %p147 = por %p145, %p146
      %p148 = scmp.ne.s32.totalorder %s139, %s140
      %p149 = scmp.eq.s32.totalorder %s22, 0
      %p150 = por %p148, %p149
      %p151 = scmp.ne.s32.totalorder %s139, %s140
      %p152 = scmp.eq.s32.totalorder %s23, 1
      %p153 = por %p151, %p152
      %p155 = scmp.ne.s32.totalorder %s140, %s154
      %p156 = scmp.eq.s32.totalorder %s23, 0
      %p157 = por %p155, %p156
      %s159 = sadd.s32 %s158, 1
      %p162 = scmp.eq.s32.totalorder %s17, 1
      %p163 = scmp.ne.s32.totalorder %s158, %s160
      %p164 = scmp.eq.s32.totalorder %s17, 0
      %p165 = por %p163, %p164
      %p166 = scmp.ne.s32.totalorder %s158, %s160
      %p167 = scmp.eq.s32.totalorder %s22, 1
      %p168 = por %p166, %p167
      %p169 = scmp.ne.s32.totalorder %s160, %s161
      %p170 = scmp.eq.s32.totalorder %s22, 0
      %p171 = por %p169, %p170
      %p172 = scmp.ne.s32.totalorder %s160, %s161
      %p173 = scmp.eq.s32.totalorder %s23, 1
      %p174 = por %p172, %p173
      %p176 = scmp.ne.s32.totalorder %s161, %s175
      %p177 = scmp.eq.s32.totalorder %s23, 0
      %p178 = por %p176, %p177
      %s180 = sadd.s32 %s179, 1
      %p183 = scmp.eq.s32.totalorder %s17, 1
      %p184 = scmp.ne.s32.totalorder %s179, %s181
      %p185 = scmp.eq.s32.totalorder %s17, 0
      %p186 = por %p184, %p185
      %p187 = scmp.ne.s32.totalorder %s179, %s181
      %p188 = scmp.eq.s32.totalorder %s22, 1
      %p189 = por %p187, %p188
      %p190 = scmp.ne.s32.totalorder %s181, %s182
      %p191 = scmp.eq.s32.totalorder %s22, 0
      %p192 = por %p190, %p191
      %p193 = scmp.ne.s32.totalorder %s181, %s182
      %p194 = scmp.eq.s32.totalorder %s23, 1
      %p195 = por %p193, %p194
      %p197 = scmp.ne.s32.totalorder %s182, %s196
      %p198 = scmp.eq.s32.totalorder %s23, 0
      %p199 = por %p197, %p198
      %s201 = sadd.s32 %s200, 1
      %p204 = scmp.eq.s32.totalorder %s17, 1
      %p205 = scmp.ne.s32.totalorder %s200, %s202
      %p206 = scmp.eq.s32.totalorder %s17, 0
      %p207 = por %p205, %p206
      %p208 = scmp.ne.s32.totalorder %s200, %s202
      %p209 = scmp.eq.s32.totalorder %s22, 1
      %p210 = por %p208, %p209
      %p211 = scmp.ne.s32.totalorder %s202, %s203
      %p212 = scmp.eq.s32.totalorder %s22, 0
      %p213 = por %p211, %p212
      %p214 = scmp.ne.s32.totalorder %s202, %s203
      %p215 = scmp.eq.s32.totalorder %s23, 1
      %p216 = por %p214, %p215
      %p218 = scmp.ne.s32.totalorder %s203, %s217
      %p219 = scmp.eq.s32.totalorder %s23, 0
      %p220 = por %p218, %p219
      %s221 = ssub.s32 %s24, %s36
      %s222 = ssub.s32 %s25, %s32
      %s223 = sor.u32 %s221, %s222
      %p224 = scmp.eq.s32.totalorder %s223, 0
      %s226 = sadd.s32 %s225, 1
      %s227 = scalar_select %p224, %s225, %s226
      %p230 = pneg %p224
      %p231 = scmp.eq.s32.totalorder %s17, 1
      %p232 = por %p230, %p231
      %p233 = scmp.ne.s32.totalorder %s225, %s228
      %p234 = scmp.eq.s32.totalorder %s17, 0
      %p235 = por %p233, %p234
      %p236 = scmp.ne.s32.totalorder %s225, %s228
      %p237 = scmp.eq.s32.totalorder %s22, 1
      %p238 = por %p236, %p237
      %p239 = scmp.ne.s32.totalorder %s228, %s229
      %p240 = scmp.eq.s32.totalorder %s22, 0
      %p241 = por %p239, %p240
      %p242 = scmp.ne.s32.totalorder %s228, %s229
      %p243 = scmp.eq.s32.totalorder %s23, 1
      %p244 = por %p242, %p243
      %p246 = scmp.ne.s32.totalorder %s229, %s245
      %p247 = scmp.eq.s32.totalorder %s23, 0
      %p248 = por %p246, %p247
      %p249 = scmp.le.s32.totalorder 1, %s17
      %p250 = scmp.lt.s32.totalorder %s17, 3
      %p251 = pnand %p249, %p250
      %p252 = pneg %p251
      // Predicated region
      $region9: #{tpu_custom_call.1} parent=5 // pred_check
        _
      $region10: #{tpu_custom_call.1} parent=5 // pred_check_branch
        %254 = sbr.rel (%p251) target = $region12
      $region11: #{tpu_custom_call.1} parent=5 // pred_region
        %s255 = ssub.s32 %s17, 1
        // Predicated region
        $region13: #{tpu_custom_call.1} parent=11 // pred_check
          %p256 = pneg %p108
        $region14: #{tpu_custom_call.1} parent=11 // pred_check_branch
          %258 = sbr.rel (%p256) target = $region16
        $region15: #{tpu_custom_call.1} parent=11 // pred_region
          _
        $region16: #{tpu_custom_call.1} parent=11 // pred_fallthru
          _
        // Predicated region
        $region17: #{tpu_custom_call.1} parent=11 // pred_check
          %p259 = pneg %p129
        $region18: #{tpu_custom_call.1} parent=11 // pred_check_branch
          %261 = sbr.rel (%p259) target = $region20
        $region19: #{tpu_custom_call.1} parent=11 // pred_region
          _
        $region20: #{tpu_custom_call.1} parent=11 // pred_fallthru
          _
        // Predicated region
        $region21: #{tpu_custom_call.1} parent=11 // pred_check
          %p262 = pneg %p150
        $region22: #{tpu_custom_call.1} parent=11 // pred_check_branch
          %264 = sbr.rel (%p262) target = $region24
        $region23: #{tpu_custom_call.1} parent=11 // pred_region
          _
        $region24: #{tpu_custom_call.1} parent=11 // pred_fallthru
          _
        // Predicated region
        $region25: #{tpu_custom_call.1} parent=11 // pred_check
          %p265 = pneg %p171
        $region26: #{tpu_custom_call.1} parent=11 // pred_check_branch
          %267 = sbr.rel (%p265) target = $region28
        $region27: #{tpu_custom_call.1} parent=11 // pred_region
          _
        $region28: #{tpu_custom_call.1} parent=11 // pred_fallthru
          _
        // Predicated region
        $region29: #{tpu_custom_call.1} parent=11 // pred_check
          %p268 = pneg %p192
        $region30: #{tpu_custom_call.1} parent=11 // pred_check_branch
          %270 = sbr.rel (%p268) target = $region32
        $region31: #{tpu_custom_call.1} parent=11 // pred_region
          _
        $region32: #{tpu_custom_call.1} parent=11 // pred_fallthru
          _
        // Predicated region
        $region33: #{tpu_custom_call.1} parent=11 // pred_check
          %p271 = pneg %p213
        $region34: #{tpu_custom_call.1} parent=11 // pred_check_branch
          %273 = sbr.rel (%p271) target = $region36
        $region35: #{tpu_custom_call.1} parent=11 // pred_region
          _
        $region36: #{tpu_custom_call.1} parent=11 // pred_fallthru
          _
      $region12: #{tpu_custom_call.1} parent=5 // pred_fallthru
        _
      %p274 = scmp.lt.s32.totalorder %s17, 2
      // Predicated region
      $region37: #{tpu_custom_call.1} parent=5 // pred_check
        %p275 = pneg %p274
      $region38: #{tpu_custom_call.1} parent=5 // pred_check_branch
        %277 = sbr.rel (%p275) target = $region40
      $region39: #{tpu_custom_call.1} parent=5 // pred_region
        // Predicated region
        $region41: #{tpu_custom_call.1} parent=39 // pred_check
          %p278 = pneg %p51
        $region42: #{tpu_custom_call.1} parent=39 // pred_check_branch
          %280 = sbr.rel (%p278) target = $region44
        $region43: #{tpu_custom_call.1} parent=39 // pred_region
          %p281 = scmp.lt.s32.totalorder %s24, 1
          %s282 = scalar_select %p281, %s24, 1
          %p283 = scmp.lt.s32.totalorder %s25, 1
          %s284 = scalar_select %p283, %s25, 1
          %s285 = smul.addr %s282, 2
          %s286 = sadd.s32 %s284, %s285
          %s287 = scalar_lea.vmem %s0, %s286
        $region44: #{tpu_custom_call.1} parent=39 // pred_fallthru
          _
        // Predicated region
        $region45: #{tpu_custom_call.1} parent=39 // pred_check
          %p288 = pneg %p81
        $region46: #{tpu_custom_call.1} parent=39 // pred_check_branch
          %290 = sbr.rel (%p288) target = $region48
        $region47: #{tpu_custom_call.1} parent=39 // pred_region
          %s291 = sadd.s32 %s25, 1
          %p292 = scmp.lt.s32.totalorder %s24, 1
          %s293 = scalar_select %p292, %s24, 1
          %p294 = scmp.lt.s32.totalorder %s291, 1
          %s295 = scalar_select %p294, %s291, 1
          %s296 = smul.addr %s293, 2
          %s297 = sadd.s32 %s295, %s296
          %s298 = scalar_lea.vmem %s1, %s297
          %s299 = sadd.s32 %s25, 1
        $region48: #{tpu_custom_call.1} parent=39 // pred_fallthru
          _
      $region40: #{tpu_custom_call.1} parent=5 // pred_fallthru
        _
      %p300 = scmp.le.s32.totalorder 1, %s17
      %p301 = scmp.lt.s32.totalorder %s17, 3
      %p302 = pnand %p300, %p301
      %p303 = pneg %p302
      // Predicated region
      $region49: #{tpu_custom_call.1} parent=5 // pred_check
        _
      $region50: #{tpu_custom_call.1} parent=5 // pred_check_branch
        %305 = sbr.rel (%p302) target = $region52
      $region51: #{tpu_custom_call.1} parent=5 // pred_region
        %s306 = ssub.s32 %s17, 1
        %p307 = scmp.lt.s32.totalorder %s26, 1
        %s308 = scalar_select %p307, %s26, 1
        %p309 = scmp.lt.s32.totalorder %s27, 1
        %s310 = scalar_select %p309, %s27, 1
        %s311 = smul.addr %s308, 2
        %s312 = sadd.s32 %s310, %s311
        %s313 = scalar_lea.vmem %s0, %s312
        %p314 = pneg %p57
        %p315 = pneg %p54
        %s316 = sadd.s32 %s27, 1
        %p317 = scmp.lt.s32.totalorder %s26, 1
        %s318 = scalar_select %p317, %s26, 1
        %p319 = scmp.lt.s32.totalorder %s316, 1
        %s320 = scalar_select %p319, %s316, 1
        %s321 = smul.addr %s318, 2
        %s322 = sadd.s32 %s320, %s321
        %s323 = scalar_lea.vmem %s1, %s322
        %p324 = pneg %p87
        %p325 = pneg %p84
        %p326 = pneg %p108
        %p327 = pneg %p105
        %p328 = pneg %p129
        %p329 = pneg %p126
        %p330 = pneg %p150
        %p331 = pneg %p147
        %p332 = pneg %p171
        %p333 = pneg %p168
        %p334 = pneg %p192
        %p335 = pneg %p189
        %p336 = pneg %p213
        %p337 = pneg %p210
        %p338 = pneg %p241
        %p339 = pneg %p238
        %s340 = sand.u32 %s228, 1
        %s341 = scalar_lea.sflag [#allocation3], %s340
        %s342 = sand.u32 %s228, 1
        %s343 = smul.addr %s342, 2
        %s344 = scalar_lea.vmem [#allocation2], %s343
        %p345 = scmp.lt.s32.totalorder %s26, 1
        %s346 = scalar_select %p345, %s26, 1
        %p347 = scmp.lt.s32.totalorder %s27, 1
        %s348 = scalar_select %p347, %s27, 1
        %s349 = smul.addr %s346, 2
        %s350 = sadd.s32 %s348, %s349
        %s351 = scalar_lea.vmem %s0, %s350
        %s352 = sadd.s32 %s27, 1
        %p353 = scmp.lt.s32.totalorder %s26, 1
        %s354 = scalar_select %p353, %s26, 1
        %p355 = scmp.lt.s32.totalorder %s352, 1
        %s356 = scalar_select %p355, %s352, 1
        %s357 = smul.addr %s354, 2
        %s358 = sadd.s32 %s356, %s357
        %s359 = scalar_lea.vmem %s1, %s358
        %s360 = sadd.s32 %s27, 1
        %v361 = vld [vmem:[%s351] sm:$0x1]
        %v362 = vld [vmem:[%s359] sm:$0x1]
        %v365 = vrot.slane %v361, 7
        %v366 = vrot.slane %v362, 7
        %367 = vrot.lane.b32.xlu0 %v365, 127
        %v368 = vpop.permute.xlu0 %367
        %369 = vrot.lane.b32.xlu0 %v366, 127
        %v370 = vpop.permute.xlu0 %369
        %vm371 = vcmask 1039360
        %v372 = vsel %vm371, %v368, %v370
        %v374 = vrot.slane %v361, 6
        %v375 = vrot.slane %v362, 6
        %376 = vrot.lane.b32.xlu0 %v374, 126
        %v377 = vpop.permute.xlu0 %376
        %378 = vrot.lane.b32.xlu0 %v375, 126
        %v379 = vpop.permute.xlu0 %378
        %vm380 = vcmask 1031168
        %v381 = vsel %vm380, %v377, %v379
        %vm383 = vcmask 1040384
        %v384 = vsel %vm383, %v361, %v372
        %vm385 = vcmask 1041408
        %v386 = vsel %vm385, %v384, %v381
        %v387 = vld [vmem:[%s2] sm:$0xff]
        %v388 = vld [vmem:[%s2 + $0x8] sm:$0xff]
        %v389 = vld [vmem:[%s2 + $0x10] sm:$0xff]
        %v390 = vld [vmem:[%s2 + $0x18] sm:$0xff]
        %v391 = vld [vmem:[%s3] sm:$0xff]
        %v392 = vld [vmem:[%s3 + $0x8] sm:$0xff]
        %v393 = vld [vmem:[%s3 + $0x10] sm:$0xff]
        %v394 = vld [vmem:[%s3 + $0x18] sm:$0xff]
        %396 = vset.pattern.permute.xlu0 0
        %397 = vperm.xlu0 %396, %v391
        %v398 = vpop.permute.xlu0 %397
        %401 = vset.pattern.permute.xlu0 0
        %402 = vperm.xlu0 %401, %v392
        %v403 = vpop.permute.xlu0 %402
        %406 = vset.pattern.permute.xlu0 0
        %407 = vperm.xlu0 %406, %v393
        %v408 = vpop.permute.xlu0 %407
        %411 = vset.pattern.permute.xlu0 0
        %412 = vperm.xlu0 %411, %v394
        %v413 = vpop.permute.xlu0 %412
        %vm415 = vcmask 23552
        %v417 = vsel %vm415, %v387, 0
        %v420 = vsel %vm415, %v388, 0
        %v423 = vsel %vm415, %v389, 0
        %v426 = vsel %vm415, %v390, 0
        %vm428 = vcmask 1042432
        %v430 = vsel %vm428, %v386, 0
        %432 = vmatprep.subr.mxu0 0.0
        %v433 = vand.u32 %v430, 4294901760
        %434 = vmatpush1.msra.mxu0 %v433
        %435 = vmatprep.subr.mxu0 0.0
        %436 = vmatpush1.msra.mxu0 0.0
        %437 = vmatprep.subr.mxu0 0.0
        %438 = vmatpush1.msra.mxu0 0.0
        %439 = vmatprep.subr.mxu0 0.0
        %440 = vmatpush1.msra.mxu0 0.0
        %441 = vmatprep.subr.mxu0 0.0
        %442 = vmatpush1.msra.mxu0 0.0
        %443 = vmatprep.subr.mxu0 0.0
        %444 = vmatpush1.msra.mxu0 0.0
        %445 = vmatprep.subr.mxu0 0.0
        %446 = vmatpush1.msra.mxu0 0.0
        %447 = vmatprep.subr.mxu0 0.0
        %448 = vmatpush1.msra.mxu0 0.0
        %449 = vmatprep.subr.mxu0 0.0
        %450 = vmatpush1.msra.mxu0 0.0
        %451 = vmatprep.subr.mxu0 0.0
        %452 = vmatpush1.msra.mxu0 0.0
        %453 = vmatprep.subr.mxu0 0.0
        %454 = vmatpush1.msra.mxu0 0.0
        %455 = vmatprep.subr.mxu0 0.0
        %456 = vmatpush1.msra.mxu0 0.0
        %457 = vmatprep.subr.mxu0 0.0
        %458 = vmatpush1.msra.mxu0 0.0
        %459 = vmatprep.subr.mxu0 0.0
        %460 = vmatpush1.msra.mxu0 0.0
        %461 = vmatprep.subr.mxu0 0.0
        %462 = vmatpush1.msra.mxu0 0.0
        %463 = vmatprep.subr.mxu0 0.0
        %464 = vmatpush1.msra.mxu0 0.0
        %465 = vmatprep.subr.mxu0 0.0
        %466 = vmatpush1.msra.mxu0 0.0
        %467 = vmatprep.subr.mxu0 0.0
        %468 = vmatpush1.msra.mxu0 0.0
        %469 = vmatprep.subr.mxu0 0.0
        %470 = vmatpush1.msra.mxu0 0.0
        %471 = vmatprep.subr.mxu0 0.0
        %472 = vmatpush1.msra.mxu0 0.0
        %473 = vmatprep.subr.mxu0 0.0
        %474 = vmatpush1.msra.mxu0 0.0
        %475 = vmatprep.subr.mxu0 0.0
        %476 = vmatpush1.msra.mxu0 0.0
        %477 = vmatprep.subr.mxu0 0.0
        %478 = vmatpush1.msra.mxu0 0.0
        %479 = vmatprep.subr.mxu0 0.0
        %480 = vmatpush1.msra.mxu0 0.0
        %481 = vmatprep.subr.mxu0 0.0
        %482 = vmatpush1.msra.mxu0 0.0
        %483 = vmatprep.subr.mxu0 0.0
        %484 = vmatpush1.msra.mxu0 0.0
        %485 = vmatprep.subr.mxu0 0.0
        %486 = vmatpush1.msra.mxu0 0.0
        %487 = vmatprep.subr.mxu0 0.0
        %488 = vmatpush1.msra.mxu0 0.0
        %489 = vmatprep.subr.mxu0 0.0
        %490 = vmatpush1.msra.mxu0 0.0
        %491 = vmatprep.subr.mxu0 0.0
        %492 = vmatpush1.msra.mxu0 0.0
        %493 = vmatprep.subr.mxu0 0.0
        %494 = vmatpush1.msra.mxu0 0.0
        %495 = vmatprep.subr.mxu0 0.0
        %496 = vmatpush1.msra.mxu0 0.0
        %497 = vmatprep.mubr.f32.mxu0 0.0
        %v498 = vand.u32 %v417, 4294901760
        %v499 = vsub.f32 %v417, %v498
        %v500 = vand.u32 %v499, 4294901760
        %v501 = vsub.f32 %v499, %v500
        %v502 = vand.u32 %v501, 4294901760
        %503 = vmatmul.mubr.f32.gmra.mrb[0].mxu0 %v502
        %v504 = vpop.f32.mrb[0].mxu0
        %v505 = vadd.f32 %v398, %v504
        %v506 = vpop.f32.mrb[0].mxu0
        %507 = vmatprep.mubr.f32.mxu0 0.0
        %v508 = vand.u32 %v420, 4294901760
        %v509 = vsub.f32 %v420, %v508
        %v510 = vand.u32 %v509, 4294901760
        %v511 = vsub.f32 %v509, %v510
        %v512 = vand.u32 %v511, 4294901760
        %513 = vmatmul.mubr.f32.gmra.mrb[0].mxu0 %v512
        %v514 = vpop.f32.mrb[0].mxu0
        %v515 = vadd.f32 %v403, %v514
        %v516 = vpop.f32.mrb[0].mxu0
        %517 = vmatprep.mubr.f32.mxu0 0.0
        %v518 = vand.u32 %v423, 4294901760
        %v519 = vsub.f32 %v423, %v518
        %v520 = vand.u32 %v519, 4294901760
        %v521 = vsub.f32 %v519, %v520
        %v522 = vand.u32 %v521, 4294901760
        %523 = vmatmul.mubr.f32.gmra.mrb[0].mxu0 %v522
        %v524 = vpop.f32.mrb[0].mxu0
        %v525 = vadd.f32 %v408, %v524
        %v526 = vpop.f32.mrb[0].mxu0
        %527 = vmatprep.mubr.f32.mxu0 0.0
        %v528 = vand.u32 %v426, 4294901760
        %v529 = vsub.f32 %v426, %v528
        %v530 = vand.u32 %v529, 4294901760
        %v531 = vsub.f32 %v529, %v530
        %v532 = vand.u32 %v531, 4294901760
        %533 = vmatmul.mubr.f32.gmra.mrb[0].mxu0 %v532
        %v534 = vpop.f32.mrb[0].mxu0
        %v535 = vadd.f32 %v413, %v534
        %v536 = vpop.f32.mrb[0].mxu0
        %537 = vdwg.mxu0
        %538 = vmatprep.subr.mxu0 0.0
        %v539 = vand.u32 %v430, 4294901760
        %v540 = vsub.f32 %v430, %v539
        %v541 = vand.u32 %v540, 4294901760
        %v542 = vsub.f32 %v540, %v541
        %v543 = vand.u32 %v542, 4294901760
        %544 = vmatpush1.msra.mxu0 %v543
        %545 = vmatprep.subr.mxu0 0.0
        %546 = vmatpush1.msra.mxu0 0.0
        %547 = vmatprep.subr.mxu0 0.0
        %548 = vmatpush1.msra.mxu0 0.0
        %549 = vmatprep.subr.mxu0 0.0
        %550 = vmatpush1.msra.mxu0 0.0
        %551 = vmatprep.subr.mxu0 0.0
        %552 = vmatpush1.msra.mxu0 0.0
        %553 = vmatprep.subr.mxu0 0.0
        %554 = vmatpush1.msra.mxu0 0.0
        %555 = vmatprep.subr.mxu0 0.0
        %556 = vmatpush1.msra.mxu0 0.0
        %557 = vmatprep.subr.mxu0 0.0
        %558 = vmatpush1.msra.mxu0 0.0
        %559 = vmatprep.subr.mxu0 0.0
        %560 = vmatpush1.msra.mxu0 0.0
        %561 = vmatprep.subr.mxu0 0.0
        %562 = vmatpush1.msra.mxu0 0.0
        %563 = vmatprep.subr.mxu0 0.0
        %564 = vmatpush1.msra.mxu0 0.0
        %565 = vmatprep.subr.mxu0 0.0
        %566 = vmatpush1.msra.mxu0 0.0
        %567 = vmatprep.subr.mxu0 0.0
        %568 = vmatpush1.msra.mxu0 0.0
        %569 = vmatprep.subr.mxu0 0.0
        %570 = vmatpush1.msra.mxu0 0.0
        %571 = vmatprep.subr.mxu0 0.0
        %572 = vmatpush1.msra.mxu0 0.0
        %573 = vmatprep.subr.mxu0 0.0
        %574 = vmatpush1.msra.mxu0 0.0
        %575 = vmatprep.subr.mxu0 0.0
        %576 = vmatpush1.msra.mxu0 0.0
        %577 = vmatprep.subr.mxu0 0.0
        %578 = vmatpush1.msra.mxu0 0.0
        %579 = vmatprep.subr.mxu0 0.0
        %580 = vmatpush1.msra.mxu0 0.0
        %581 = vmatprep.subr.mxu0 0.0
        %582 = vmatpush1.msra.mxu0 0.0
        %583 = vmatprep.subr.mxu0 0.0
        %584 = vmatpush1.msra.mxu0 0.0
        %585 = vmatprep.subr.mxu0 0.0
        %586 = vmatpush1.msra.mxu0 0.0
        %587 = vmatprep.subr.mxu0 0.0
        %588 = vmatpush1.msra.mxu0 0.0
        %589 = vmatprep.subr.mxu0 0.0
        %590 = vmatpush1.msra.mxu0 0.0
        %591 = vmatprep.subr.mxu0 0.0
        %592 = vmatpush1.msra.mxu0 0.0
        %593 = vmatprep.subr.mxu0 0.0
        %594 = vmatpush1.msra.mxu0 0.0
        %595 = vmatprep.subr.mxu0 0.0
        %596 = vmatpush1.msra.mxu0 0.0
        %597 = vmatprep.subr.mxu0 0.0
        %598 = vmatpush1.msra.mxu0 0.0
        %599 = vmatprep.subr.mxu0 0.0
        %600 = vmatpush1.msra.mxu0 0.0
        %601 = vmatprep.subr.mxu0 0.0
        %602 = vmatpush1.msra.mxu0 0.0
        %603 = vmatprep.subr.mxu0 0.0
        %604 = vmatpush1.msra.mxu0 0.0
        %605 = vmatprep.subr.mxu0 0.0
        %606 = vmatpush1.msra.mxu0 0.0
        %607 = vmatprep.mubr.f32.mxu0 0.0
        %v608 = vand.u32 %v417, 4294901760
        %609 = vmatmul.mubr.f32.gmra.mrb[0].mxu0 %v608
        %v610 = vpop.f32.mrb[0].mxu0
        %v611 = vadd.f32 %v505, %v610
        %v612 = vpop.f32.mrb[0].mxu0
        %613 = vmatprep.mubr.f32.mxu0 0.0
        %v614 = vand.u32 %v420, 4294901760
        %615 = vmatmul.mubr.f32.gmra.mrb[0].mxu0 %v614
        %v616 = vpop.f32.mrb[0].mxu0
        %v617 = vadd.f32 %v515, %v616
        %v618 = vpop.f32.mrb[0].mxu0
        %619 = vmatprep.mubr.f32.mxu0 0.0
        %v620 = vand.u32 %v423, 4294901760
        %621 = vmatmul.mubr.f32.gmra.mrb[0].mxu0 %v620
        %v622 = vpop.f32.mrb[0].mxu0
        %v623 = vadd.f32 %v525, %v622
        %v624 = vpop.f32.mrb[0].mxu0
        %625 = vmatprep.mubr.f32.mxu0 0.0
        %v626 = vand.u32 %v426, 4294901760
        %627 = vmatmul.mubr.f32.gmra.mrb[0].mxu0 %v626
        %v628 = vpop.f32.mrb[0].mxu0
        %v629 = vadd.f32 %v535, %v628
        %v630 = vpop.f32.mrb[0].mxu0
        %631 = vdwg.mxu0
        %632 = vmatprep.subr.mxu0 0.0
        %v633 = vand.u32 %v430, 4294901760
        %v634 = vsub.f32 %v430, %v633
        %635 = vmatpush1.msra.mxu0 %v634
        %636 = vmatprep.subr.mxu0 0.0
        %637 = vmatpush1.msra.mxu0 0.0
        %638 = vmatprep.subr.mxu0 0.0
        %639 = vmatpush1.msra.mxu0 0.0
        %640 = vmatprep.subr.mxu0 0.0
        %641 = vmatpush1.msra.mxu0 0.0
        %642 = vmatprep.subr.mxu0 0.0
        %643 = vmatpush1.msra.mxu0 0.0
        %644 = vmatprep.subr.mxu0 0.0
        %645 = vmatpush1.msra.mxu0 0.0
        %646 = vmatprep.subr.mxu0 0.0
        %647 = vmatpush1.msra.mxu0 0.0
        %648 = vmatprep.subr.mxu0 0.0
        %649 = vmatpush1.msra.mxu0 0.0
        %650 = vmatprep.subr.mxu0 0.0
        %651 = vmatpush1.msra.mxu0 0.0
        %652 = vmatprep.subr.mxu0 0.0
        %653 = vmatpush1.msra.mxu0 0.0
        %654 = vmatprep.subr.mxu0 0.0
        %655 = vmatpush1.msra.mxu0 0.0
        %656 = vmatprep.subr.mxu0 0.0
        %657 = vmatpush1.msra.mxu0 0.0
        %658 = vmatprep.subr.mxu0 0.0
        %659 = vmatpush1.msra.mxu0 0.0
        %660 = vmatprep.subr.mxu0 0.0
        %661 = vmatpush1.msra.mxu0 0.0
        %662 = vmatprep.subr.mxu0 0.0
        %663 = vmatpush1.msra.mxu0 0.0
        %664 = vmatprep.subr.mxu0 0.0
        %665 = vmatpush1.msra.mxu0 0.0
        %666 = vmatprep.subr.mxu0 0.0
        %667 = vmatpush1.msra.mxu0 0.0
        %668 = vmatprep.subr.mxu0 0.0
        %669 = vmatpush1.msra.mxu0 0.0
        %670 = vmatprep.subr.mxu0 0.0
        %671 = vmatpush1.msra.mxu0 0.0
        %672 = vmatprep.subr.mxu0 0.0
        %673 = vmatpush1.msra.mxu0 0.0
        %674 = vmatprep.subr.mxu0 0.0
        %675 = vmatpush1.msra.mxu0 0.0
        %676 = vmatprep.subr.mxu0 0.0
        %677 = vmatpush1.msra.mxu0 0.0
        %678 = vmatprep.subr.mxu0 0.0
        %679 = vmatpush1.msra.mxu0 0.0
        %680 = vmatprep.subr.mxu0 0.0
        %681 = vmatpush1.msra.mxu0 0.0
        %682 = vmatprep.subr.mxu0 0.0
        %683 = vmatpush1.msra.mxu0 0.0
        %684 = vmatprep.subr.mxu0 0.0
        %685 = vmatpush1.msra.mxu0 0.0
        %686 = vmatprep.subr.mxu0 0.0
        %687 = vmatpush1.msra.mxu0 0.0
        %688 = vmatprep.subr.mxu0 0.0
        %689 = vmatpush1.msra.mxu0 0.0
        %690 = vmatprep.subr.mxu0 0.0
        %691 = vmatpush1.msra.mxu0 0.0
        %692 = vmatprep.subr.mxu0 0.0
        %693 = vmatpush1.msra.mxu0 0.0
        %694 = vmatprep.subr.mxu0 0.0
        %695 = vmatpush1.msra.mxu0 0.0
        %696 = vmatprep.subr.mxu0 0.0
        %697 = vmatpush1.msra.mxu0 0.0
        %698 = vmatprep.mubr.f32.mxu0 0.0
        %v699 = vand.u32 %v417, 4294901760
        %v700 = vsub.f32 %v417, %v699
        %701 = vmatmul.mubr.f32.gmra.mrb[0].mxu0 %v700
        %v702 = vpop.f32.mrb[0].mxu0
        %v703 = vadd.f32 %v611, %v702
        %v704 = vpop.f32.mrb[0].mxu0
        %705 = vmatprep.mubr.f32.mxu0 0.0
        %v706 = vand.u32 %v420, 4294901760
        %v707 = vsub.f32 %v420, %v706
        %708 = vmatmul.mubr.f32.gmra.mrb[0].mxu0 %v707
        %v709 = vpop.f32.mrb[0].mxu0
        %v710 = vadd.f32 %v617, %v709
        %v711 = vpop.f32.mrb[0].mxu0
        %712 = vmatprep.mubr.f32.mxu0 0.0
        %v713 = vand.u32 %v423, 4294901760
        %v714 = vsub.f32 %v423, %v713
        %715 = vmatmul.mubr.f32.gmra.mrb[0].mxu0 %v714
        %v716 = vpop.f32.mrb[0].mxu0
        %v717 = vadd.f32 %v623, %v716
        %v718 = vpop.f32.mrb[0].mxu0
        %719 = vmatprep.mubr.f32.mxu0 0.0
        %v720 = vand.u32 %v426, 4294901760
        %v721 = vsub.f32 %v426, %v720
        %722 = vmatmul.mubr.f32.gmra.mrb[0].mxu0 %v721
        %v723 = vpop.f32.mrb[0].mxu0
        %v724 = vadd.f32 %v629, %v723
        %v725 = vpop.f32.mrb[0].mxu0
        %726 = vdwg.mxu0
        %727 = vmatprep.subr.mxu0 0.0
        %v728 = vand.u32 %v430, 4294901760
        %729 = vmatpush1.msra.mxu0 %v728
        %730 = vmatprep.subr.mxu0 0.0
        %731 = vmatpush1.msra.mxu0 0.0
        %732 = vmatprep.subr.mxu0 0.0
        %733 = vmatpush1.msra.mxu0 0.0
        %734 = vmatprep.subr.mxu0 0.0
        %735 = vmatpush1.msra.mxu0 0.0
        %736 = vmatprep.subr.mxu0 0.0
        %737 = vmatpush1.msra.mxu0 0.0
        %738 = vmatprep.subr.mxu0 0.0
        %739 = vmatpush1.msra.mxu0 0.0
        %740 = vmatprep.subr.mxu0 0.0
        %741 = vmatpush1.msra.mxu0 0.0
        %742 = vmatprep.subr.mxu0 0.0
        %743 = vmatpush1.msra.mxu0 0.0
        %744 = vmatprep.subr.mxu0 0.0
        %745 = vmatpush1.msra.mxu0 0.0
        %746 = vmatprep.subr.mxu0 0.0
        %747 = vmatpush1.msra.mxu0 0.0
        %748 = vmatprep.subr.mxu0 0.0
        %749 = vmatpush1.msra.mxu0 0.0
        %750 = vmatprep.subr.mxu0 0.0
        %751 = vmatpush1.msra.mxu0 0.0
        %752 = vmatprep.subr.mxu0 0.0
        %753 = vmatpush1.msra.mxu0 0.0
        %754 = vmatprep.subr.mxu0 0.0
        %755 = vmatpush1.msra.mxu0 0.0
        %756 = vmatprep.subr.mxu0 0.0
        %757 = vmatpush1.msra.mxu0 0.0
        %758 = vmatprep.subr.mxu0 0.0
        %759 = vmatpush1.msra.mxu0 0.0
        %760 = vmatprep.subr.mxu0 0.0
        %761 = vmatpush1.msra.mxu0 0.0
        %762 = vmatprep.subr.mxu0 0.0
        %763 = vmatpush1.msra.mxu0 0.0
        %764 = vmatprep.subr.mxu0 0.0
        %765 = vmatpush1.msra.mxu0 0.0
        %766 = vmatprep.subr.mxu0 0.0
        %767 = vmatpush1.msra.mxu0 0.0
        %768 = vmatprep.subr.mxu0 0.0
        %769 = vmatpush1.msra.mxu0 0.0
        %770 = vmatprep.subr.mxu0 0.0
        %771 = vmatpush1.msra.mxu0 0.0
        %772 = vmatprep.subr.mxu0 0.0
        %773 = vmatpush1.msra.mxu0 0.0
        %774 = vmatprep.subr.mxu0 0.0
        %775 = vmatpush1.msra.mxu0 0.0
        %776 = vmatprep.subr.mxu0 0.0
        %777 = vmatpush1.msra.mxu0 0.0
        %778 = vmatprep.subr.mxu0 0.0
        %779 = vmatpush1.msra.mxu0 0.0
        %780 = vmatprep.subr.mxu0 0.0
        %781 = vmatpush1.msra.mxu0 0.0
        %782 = vmatprep.subr.mxu0 0.0
        %783 = vmatpush1.msra.mxu0 0.0
        %784 = vmatprep.subr.mxu0 0.0
        %785 = vmatpush1.msra.mxu0 0.0
        %786 = vmatprep.subr.mxu0 0.0
        %787 = vmatpush1.msra.mxu0 0.0
        %788 = vmatprep.subr.mxu0 0.0
        %789 = vmatpush1.msra.mxu0 0.0
        %790 = vmatprep.subr.mxu0 0.0
        %791 = vmatpush1.msra.mxu0 0.0
        %792 = vmatprep.mubr.f32.mxu0 0.0
        %v793 = vand.u32 %v417, 4294901760
        %v794 = vsub.f32 %v417, %v793
        %v795 = vand.u32 %v794, 4294901760
        %796 = vmatmul.mubr.f32.gmra.mrb[0].mxu0 %v795
        %v797 = vpop.f32.mrb[0].mxu0
        %v798 = vadd.f32 %v703, %v797
        %v799 = vpop.f32.mrb[0].mxu0
        %800 = vmatprep.mubr.f32.mxu0 0.0
        %v801 = vand.u32 %v420, 4294901760
        %v802 = vsub.f32 %v420, %v801
        %v803 = vand.u32 %v802, 4294901760
        %804 = vmatmul.mubr.f32.gmra.mrb[0].mxu0 %v803
        %v805 = vpop.f32.mrb[0].mxu0
        %v806 = vadd.f32 %v710, %v805
        %v807 = vpop.f32.mrb[0].mxu0
        %808 = vmatprep.mubr.f32.mxu0 0.0
        %v809 = vand.u32 %v423, 4294901760
        %v810 = vsub.f32 %v423, %v809
        %v811 = vand.u32 %v810, 4294901760
        %812 = vmatmul.mubr.f32.gmra.mrb[0].mxu0 %v811
        %v813 = vpop.f32.mrb[0].mxu0
        %v814 = vadd.f32 %v717, %v813
        %v815 = vpop.f32.mrb[0].mxu0
        %816 = vmatprep.mubr.f32.mxu0 0.0
        %v817 = vand.u32 %v426, 4294901760
        %v818 = vsub.f32 %v426, %v817
        %v819 = vand.u32 %v818, 4294901760
        %820 = vmatmul.mubr.f32.gmra.mrb[0].mxu0 %v819
        %v821 = vpop.f32.mrb[0].mxu0
        %v822 = vadd.f32 %v724, %v821
        %v823 = vpop.f32.mrb[0].mxu0
        %824 = vdwg.mxu0
        %825 = vmatprep.subr.mxu0 0.0
        %v826 = vand.u32 %v430, 4294901760
        %v827 = vsub.f32 %v430, %v826
        %v828 = vand.u32 %v827, 4294901760
        %829 = vmatpush1.msra.mxu0 %v828
        %830 = vmatprep.subr.mxu0 0.0
        %831 = vmatpush1.msra.mxu0 0.0
        %832 = vmatprep.subr.mxu0 0.0
        %833 = vmatpush1.msra.mxu0 0.0
        %834 = vmatprep.subr.mxu0 0.0
        %835 = vmatpush1.msra.mxu0 0.0
        %836 = vmatprep.subr.mxu0 0.0
        %837 = vmatpush1.msra.mxu0 0.0
        %838 = vmatprep.subr.mxu0 0.0
        %839 = vmatpush1.msra.mxu0 0.0
        %840 = vmatprep.subr.mxu0 0.0
        %841 = vmatpush1.msra.mxu0 0.0
        %842 = vmatprep.subr.mxu0 0.0
        %843 = vmatpush1.msra.mxu0 0.0
        %844 = vmatprep.subr.mxu0 0.0
        %845 = vmatpush1.msra.mxu0 0.0
        %846 = vmatprep.subr.mxu0 0.0
        %847 = vmatpush1.msra.mxu0 0.0
        %848 = vmatprep.subr.mxu0 0.0
        %849 = vmatpush1.msra.mxu0 0.0
        %850 = vmatprep.subr.mxu0 0.0
        %851 = vmatpush1.msra.mxu0 0.0
        %852 = vmatprep.subr.mxu0 0.0
        %853 = vmatpush1.msra.mxu0 0.0
        %854 = vmatprep.subr.mxu0 0.0
        %855 = vmatpush1.msra.mxu0 0.0
        %856 = vmatprep.subr.mxu0 0.0
        %857 = vmatpush1.msra.mxu0 0.0
        %858 = vmatprep.subr.mxu0 0.0
        %859 = vmatpush1.msra.mxu0 0.0
        %860 = vmatprep.subr.mxu0 0.0
        %861 = vmatpush1.msra.mxu0 0.0
        %862 = vmatprep.subr.mxu0 0.0
        %863 = vmatpush1.msra.mxu0 0.0
        %864 = vmatprep.subr.mxu0 0.0
        %865 = vmatpush1.msra.mxu0 0.0
        %866 = vmatprep.subr.mxu0 0.0
        %867 = vmatpush1.msra.mxu0 0.0
        %868 = vmatprep.subr.mxu0 0.0
        %869 = vmatpush1.msra.mxu0 0.0
        %870 = vmatprep.subr.mxu0 0.0
        %871 = vmatpush1.msra.mxu0 0.0
        %872 = vmatprep.subr.mxu0 0.0
        %873 = vmatpush1.msra.mxu0 0.0
        %874 = vmatprep.subr.mxu0 0.0
        %875 = vmatpush1.msra.mxu0 0.0
        %876 = vmatprep.subr.mxu0 0.0
        %877 = vmatpush1.msra.mxu0 0.0
        %878 = vmatprep.subr.mxu0 0.0
        %879 = vmatpush1.msra.mxu0 0.0
        %880 = vmatprep.subr.mxu0 0.0
        %881 = vmatpush1.msra.mxu0 0.0
        %882 = vmatprep.subr.mxu0 0.0
        %883 = vmatpush1.msra.mxu0 0.0
        %884 = vmatprep.subr.mxu0 0.0
        %885 = vmatpush1.msra.mxu0 0.0
        %886 = vmatprep.subr.mxu0 0.0
        %887 = vmatpush1.msra.mxu0 0.0
        %888 = vmatprep.subr.mxu0 0.0
        %889 = vmatpush1.msra.mxu0 0.0
        %890 = vmatprep.subr.mxu0 0.0
        %891 = vmatpush1.msra.mxu0 0.0
        %892 = vmatprep.mubr.f32.mxu0 0.0
        %v893 = vand.u32 %v417, 4294901760
        %894 = vmatmul.mubr.f32.gmra.mrb[0].mxu0 %v893
        %v895 = vpop.f32.mrb[0].mxu0
        %v896 = vadd.f32 %v798, %v895
        %v897 = vpop.f32.mrb[0].mxu0
        %898 = vmatprep.mubr.f32.mxu0 0.0
        %v899 = vand.u32 %v420, 4294901760
        %900 = vmatmul.mubr.f32.gmra.mrb[0].mxu0 %v899
        %v901 = vpop.f32.mrb[0].mxu0
        %v902 = vadd.f32 %v806, %v901
        %v903 = vpop.f32.mrb[0].mxu0
        %904 = vmatprep.mubr.f32.mxu0 0.0
        %v905 = vand.u32 %v423, 4294901760
        %906 = vmatmul.mubr.f32.gmra.mrb[0].mxu0 %v905
        %v907 = vpop.f32.mrb[0].mxu0
        %v908 = vadd.f32 %v814, %v907
        %v909 = vpop.f32.mrb[0].mxu0
        %910 = vmatprep.mubr.f32.mxu0 0.0
        %v911 = vand.u32 %v426, 4294901760
        %912 = vmatmul.mubr.f32.gmra.mrb[0].mxu0 %v911
        %v913 = vpop.f32.mrb[0].mxu0
        %v914 = vadd.f32 %v822, %v913
        %v915 = vpop.f32.mrb[0].mxu0
        %916 = vdwg.mxu0
        %917 = vmatprep.subr.mxu0 0.0
        %v918 = vand.u32 %v430, 4294901760
        %919 = vmatpush1.msra.mxu0 %v918
        %920 = vmatprep.subr.mxu0 0.0
        %921 = vmatpush1.msra.mxu0 0.0
        %922 = vmatprep.subr.mxu0 0.0
        %923 = vmatpush1.msra.mxu0 0.0
        %924 = vmatprep.subr.mxu0 0.0
        %925 = vmatpush1.msra.mxu0 0.0
        %926 = vmatprep.subr.mxu0 0.0
        %927 = vmatpush1.msra.mxu0 0.0
        %928 = vmatprep.subr.mxu0 0.0
        %929 = vmatpush1.msra.mxu0 0.0
        %930 = vmatprep.subr.mxu0 0.0
        %931 = vmatpush1.msra.mxu0 0.0
        %932 = vmatprep.subr.mxu0 0.0
        %933 = vmatpush1.msra.mxu0 0.0
        %934 = vmatprep.subr.mxu0 0.0
        %935 = vmatpush1.msra.mxu0 0.0
        %936 = vmatprep.subr.mxu0 0.0
        %937 = vmatpush1.msra.mxu0 0.0
        %938 = vmatprep.subr.mxu0 0.0
        %939 = vmatpush1.msra.mxu0 0.0
        %940 = vmatprep.subr.mxu0 0.0
        %941 = vmatpush1.msra.mxu0 0.0
        %942 = vmatprep.subr.mxu0 0.0
        %943 = vmatpush1.msra.mxu0 0.0
        %944 = vmatprep.subr.mxu0 0.0
        %945 = vmatpush1.msra.mxu0 0.0
        %946 = vmatprep.subr.mxu0 0.0
        %947 = vmatpush1.msra.mxu0 0.0
        %948 = vmatprep.subr.mxu0 0.0
        %949 = vmatpush1.msra.mxu0 0.0
        %950 = vmatprep.subr.mxu0 0.0
        %951 = vmatpush1.msra.mxu0 0.0
        %952 = vmatprep.subr.mxu0 0.0
        %953 = vmatpush1.msra.mxu0 0.0
        %954 = vmatprep.subr.mxu0 0.0
        %955 = vmatpush1.msra.mxu0 0.0
        %956 = vmatprep.subr.mxu0 0.0
        %957 = vmatpush1.msra.mxu0 0.0
        %958 = vmatprep.subr.mxu0 0.0
        %959 = vmatpush1.msra.mxu0 0.0
        %960 = vmatprep.subr.mxu0 0.0
        %961 = vmatpush1.msra.mxu0 0.0
        %962 = vmatprep.subr.mxu0 0.0
        %963 = vmatpush1.msra.mxu0 0.0
        %964 = vmatprep.subr.mxu0 0.0
        %965 = vmatpush1.msra.mxu0 0.0
        %966 = vmatprep.subr.mxu0 0.0
        %967 = vmatpush1.msra.mxu0 0.0
        %968 = vmatprep.subr.mxu0 0.0
        %969 = vmatpush1.msra.mxu0 0.0
        %970 = vmatprep.subr.mxu0 0.0
        %971 = vmatpush1.msra.mxu0 0.0
        %972 = vmatprep.subr.mxu0 0.0
        %973 = vmatpush1.msra.mxu0 0.0
        %974 = vmatprep.subr.mxu0 0.0
        %975 = vmatpush1.msra.mxu0 0.0
        %976 = vmatprep.subr.mxu0 0.0
        %977 = vmatpush1.msra.mxu0 0.0
        %978 = vmatprep.subr.mxu0 0.0
        %979 = vmatpush1.msra.mxu0 0.0
        %980 = vmatprep.subr.mxu0 0.0
        %981 = vmatpush1.msra.mxu0 0.0
        %982 = vmatprep.mubr.f32.mxu0 0.0
        %v983 = vand.u32 %v417, 4294901760
        %984 = vmatmul.mubr.f32.gmra.mrb[0].mxu0 %v983
        %v985 = vpop.f32.mrb[0].mxu0
        %v986 = vadd.f32 %v896, %v985
        %v987 = vpop.f32.mrb[0].mxu0
        %988 = vmatprep.mubr.f32.mxu0 0.0
        %v989 = vand.u32 %v420, 4294901760
        %990 = vmatmul.mubr.f32.gmra.mrb[0].mxu0 %v989
        %v991 = vpop.f32.mrb[0].mxu0
        %v992 = vadd.f32 %v902, %v991
        %v993 = vpop.f32.mrb[0].mxu0
        %994 = vmatprep.mubr.f32.mxu0 0.0
        %v995 = vand.u32 %v423, 4294901760
        %996 = vmatmul.mubr.f32.gmra.mrb[0].mxu0 %v995
        %v997 = vpop.f32.mrb[0].mxu0
        %v998 = vadd.f32 %v908, %v997
        %v999 = vpop.f32.mrb[0].mxu0
        %1000 = vmatprep.mubr.f32.mxu0 0.0
        %v1001 = vand.u32 %v426, 4294901760
        %1002 = vmatmul.mubr.f32.gmra.mrb[0].mxu0 %v1001
        %v1003 = vpop.f32.mrb[0].mxu0
        %v1004 = vadd.f32 %v914, %v1003
        %v1005 = vpop.f32.mrb[0].mxu0
        %1006 = vdwg.mxu0
        %v1007 = vmax.f32 %v986, 0.0
        %v1008 = vmax.f32 %v992, 0.0
        %v1009 = vmax.f32 %v998, 0.0
        %v1010 = vmax.f32 %v1004, 0.0
        %v1011 = vld [vmem:[%s4] sm:$0xff]
        %v1012 = vld [vmem:[%s4 + $0x8] sm:$0xff]
        %v1013 = vld [vmem:[%s5] sm:$0xff]
        %v1014 = vld [vmem:[%s5 + $0x8] sm:$0xff]
        %1016 = vset.pattern.permute.xlu0 0
        %1017 = vperm.xlu0 %1016, %v1013
        %v1018 = vpop.permute.xlu0 %1017
        %1021 = vset.pattern.permute.xlu0 0
        %1022 = vperm.xlu0 %1021, %v1014
        %v1023 = vpop.permute.xlu0 %1022
        %vm1025 = vcmask 261120
        %v1027 = vsel %vm1025, %v1011, 0
        %v1030 = vsel %vm1025, %v1012, 0
        %1032 = vmatprep.subr.mxu0 0.0
        %v1033 = vand.u32 %v1007, 4294901760
        %1034 = vmatpush1.msra.mxu0 %v1033
        %1035 = vmatprep.subr.mxu0 0.0
        %v1036 = vand.u32 %v1008, 4294901760
        %1037 = vmatpush1.msra.mxu0 %v1036
        %1038 = vmatprep.subr.mxu0 0.0
        %v1039 = vand.u32 %v1009, 4294901760
        %1040 = vmatpush1.msra.mxu0 %v1039
        %1041 = vmatprep.subr.mxu0 0.0
        %v1042 = vand.u32 %v1010, 4294901760
        %1043 = vmatpush1.msra.mxu0 %v1042
        %1044 = vmatprep.subr.mxu0 0.0
        %1045 = vmatpush1.msra.mxu0 0.0
        %1046 = vmatprep.subr.mxu0 0.0
        %1047 = vmatpush1.msra.mxu0 0.0
        %1048 = vmatprep.subr.mxu0 0.0
        %1049 = vmatpush1.msra.mxu0 0.0
        %1050 = vmatprep.subr.mxu0 0.0
        %1051 = vmatpush1.msra.mxu0 0.0
        %1052 = vmatprep.subr.mxu0 0.0
        %1053 = vmatpush1.msra.mxu0 0.0
        %1054 = vmatprep.subr.mxu0 0.0
        %1055 = vmatpush1.msra.mxu0 0.0
        %1056 = vmatprep.subr.mxu0 0.0
        %1057 = vmatpush1.msra.mxu0 0.0
        %1058 = vmatprep.subr.mxu0 0.0
        %1059 = vmatpush1.msra.mxu0 0.0
        %1060 = vmatprep.subr.mxu0 0.0
        %1061 = vmatpush1.msra.mxu0 0.0
        %1062 = vmatprep.subr.mxu0 0.0
        %1063 = vmatpush1.msra.mxu0 0.0
        %1064 = vmatprep.subr.mxu0 0.0
        %1065 = vmatpush1.msra.mxu0 0.0
        %1066 = vmatprep.subr.mxu0 0.0
        %1067 = vmatpush1.msra.mxu0 0.0
        %1068 = vmatprep.subr.mxu0 0.0
        %1069 = vmatpush1.msra.mxu0 0.0
        %1070 = vmatprep.subr.mxu0 0.0
        %1071 = vmatpush1.msra.mxu0 0.0
        %1072 = vmatprep.subr.mxu0 0.0
        %1073 = vmatpush1.msra.mxu0 0.0
        %1074 = vmatprep.subr.mxu0 0.0
        %1075 = vmatpush1.msra.mxu0 0.0
        %1076 = vmatprep.subr.mxu0 0.0
        %1077 = vmatpush1.msra.mxu0 0.0
        %1078 = vmatprep.subr.mxu0 0.0
        %1079 = vmatpush1.msra.mxu0 0.0
        %1080 = vmatprep.subr.mxu0 0.0
        %1081 = vmatpush1.msra.mxu0 0.0
        %1082 = vmatprep.subr.mxu0 0.0
        %1083 = vmatpush1.msra.mxu0 0.0
        %1084 = vmatprep.subr.mxu0 0.0
        %1085 = vmatpush1.msra.mxu0 0.0
        %1086 = vmatprep.subr.mxu0 0.0
        %1087 = vmatpush1.msra.mxu0 0.0
        %1088 = vmatprep.subr.mxu0 0.0
        %1089 = vmatpush1.msra.mxu0 0.0
        %1090 = vmatprep.subr.mxu0 0.0
        %1091 = vmatpush1.msra.mxu0 0.0
        %1092 = vmatprep.subr.mxu0 0.0
        %1093 = vmatpush1.msra.mxu0 0.0
        %1094 = vmatprep.subr.mxu0 0.0
        %1095 = vmatpush1.msra.mxu0 0.0
        %1096 = vmatprep.subr.mxu0 0.0
        %1097 = vmatpush1.msra.mxu0 0.0
        %1098 = vmatprep.subr.mxu0 0.0
        %1099 = vmatpush1.msra.mxu0 0.0
        %1100 = vmatprep.mubr.f32.mxu0 0.0
        %v1101 = vand.u32 %v1027, 4294901760
        %v1102 = vsub.f32 %v1027, %v1101
        %v1103 = vand.u32 %v1102, 4294901760
        %v1104 = vsub.f32 %v1102, %v1103
        %v1105 = vand.u32 %v1104, 4294901760
        %1106 = vmatmul.mubr.f32.gmra.mrb[0].mxu0 %v1105
        %v1107 = vpop.f32.mrb[0].mxu0
        %v1108 = vadd.f32 %v1018, %v1107
        %v1109 = vpop.f32.mrb[0].mxu0
        %1110 = vmatprep.mubr.f32.mxu0 0.0
        %v1111 = vand.u32 %v1030, 4294901760
        %v1112 = vsub.f32 %v1030, %v1111
        %v1113 = vand.u32 %v1112, 4294901760
        %v1114 = vsub.f32 %v1112, %v1113
        %v1115 = vand.u32 %v1114, 4294901760
        %1116 = vmatmul.mubr.f32.gmra.mrb[0].mxu0 %v1115
        %v1117 = vpop.f32.mrb[0].mxu0
        %v1118 = vadd.f32 %v1023, %v1117
        %v1119 = vpop.f32.mrb[0].mxu0
        %1120 = vdwg.mxu0
        %1121 = vmatprep.subr.mxu0 0.0
        %v1122 = vand.u32 %v1007, 4294901760
        %v1123 = vsub.f32 %v1007, %v1122
        %v1124 = vand.u32 %v1123, 4294901760
        %v1125 = vsub.f32 %v1123, %v1124
        %v1126 = vand.u32 %v1125, 4294901760
        %1127 = vmatpush1.msra.mxu0 %v1126
        %1128 = vmatprep.subr.mxu0 0.0
        %v1129 = vand.u32 %v1008, 4294901760
        %v1130 = vsub.f32 %v1008, %v1129
        %v1131 = vand.u32 %v1130, 4294901760
        %v1132 = vsub.f32 %v1130, %v1131
        %v1133 = vand.u32 %v1132, 4294901760
        %1134 = vmatpush1.msra.mxu0 %v1133
        %1135 = vmatprep.subr.mxu0 0.0
        %v1136 = vand.u32 %v1009, 4294901760
        %v1137 = vsub.f32 %v1009, %v1136
        %v1138 = vand.u32 %v1137, 4294901760
        %v1139 = vsub.f32 %v1137, %v1138
        %v1140 = vand.u32 %v1139, 4294901760
        %1141 = vmatpush1.msra.mxu0 %v1140
        %1142 = vmatprep.subr.mxu0 0.0
        %v1143 = vand.u32 %v1010, 4294901760
        %v1144 = vsub.f32 %v1010, %v1143
        %v1145 = vand.u32 %v1144, 4294901760
        %v1146 = vsub.f32 %v1144, %v1145
        %v1147 = vand.u32 %v1146, 4294901760
        %1148 = vmatpush1.msra.mxu0 %v1147
        %1149 = vmatprep.subr.mxu0 0.0
        %1150 = vmatpush1.msra.mxu0 0.0
        %1151 = vmatprep.subr.mxu0 0.0
        %1152 = vmatpush1.msra.mxu0 0.0
        %1153 = vmatprep.subr.mxu0 0.0
        %1154 = vmatpush1.msra.mxu0 0.0
        %1155 = vmatprep.subr.mxu0 0.0
        %1156 = vmatpush1.msra.mxu0 0.0
        %1157 = vmatprep.subr.mxu0 0.0
        %1158 = vmatpush1.msra.mxu0 0.0
        %1159 = vmatprep.subr.mxu0 0.0
        %1160 = vmatpush1.msra.mxu0 0.0
        %1161 = vmatprep.subr.mxu0 0.0
        %1162 = vmatpush1.msra.mxu0 0.0
        %1163 = vmatprep.subr.mxu0 0.0
        %1164 = vmatpush1.msra.mxu0 0.0
        %1165 = vmatprep.subr.mxu0 0.0
        %1166 = vmatpush1.msra.mxu0 0.0
        %1167 = vmatprep.subr.mxu0 0.0
        %1168 = vmatpush1.msra.mxu0 0.0
        %1169 = vmatprep.subr.mxu0 0.0
        %1170 = vmatpush1.msra.mxu0 0.0
        %1171 = vmatprep.subr.mxu0 0.0
        %1172 = vmatpush1.msra.mxu0 0.0
        %1173 = vmatprep.subr.mxu0 0.0
        %1174 = vmatpush1.msra.mxu0 0.0
        %1175 = vmatprep.subr.mxu0 0.0
        %1176 = vmatpush1.msra.mxu0 0.0
        %1177 = vmatprep.subr.mxu0 0.0
        %1178 = vmatpush1.msra.mxu0 0.0
        %1179 = vmatprep.subr.mxu0 0.0
        %1180 = vmatpush1.msra.mxu0 0.0
        %1181 = vmatprep.subr.mxu0 0.0
        %1182 = vmatpush1.msra.mxu0 0.0
        %1183 = vmatprep.subr.mxu0 0.0
        %1184 = vmatpush1.msra.mxu0 0.0
        %1185 = vmatprep.subr.mxu0 0.0
        %1186 = vmatpush1.msra.mxu0 0.0
        %1187 = vmatprep.subr.mxu0 0.0
        %1188 = vmatpush1.msra.mxu0 0.0
        %1189 = vmatprep.subr.mxu0 0.0
        %1190 = vmatpush1.msra.mxu0 0.0
        %1191 = vmatprep.subr.mxu0 0.0
        %1192 = vmatpush1.msra.mxu0 0.0
        %1193 = vmatprep.subr.mxu0 0.0
        %1194 = vmatpush1.msra.mxu0 0.0
        %1195 = vmatprep.subr.mxu0 0.0
        %1196 = vmatpush1.msra.mxu0 0.0
        %1197 = vmatprep.subr.mxu0 0.0
        %1198 = vmatpush1.msra.mxu0 0.0
        %1199 = vmatprep.subr.mxu0 0.0
        %1200 = vmatpush1.msra.mxu0 0.0
        %1201 = vmatprep.subr.mxu0 0.0
        %1202 = vmatpush1.msra.mxu0 0.0
        %1203 = vmatprep.subr.mxu0 0.0
        %1204 = vmatpush1.msra.mxu0 0.0
        %1205 = vmatprep.mubr.f32.mxu0 0.0
        %v1206 = vand.u32 %v1027, 4294901760
        %1207 = vmatmul.mubr.f32.gmra.mrb[0].mxu0 %v1206
        %v1208 = vpop.f32.mrb[0].mxu0
        %v1209 = vadd.f32 %v1108, %v1208
        %v1210 = vpop.f32.mrb[0].mxu0
        %1211 = vmatprep.mubr.f32.mxu0 0.0
        %v1212 = vand.u32 %v1030, 4294901760
        %1213 = vmatmul.mubr.f32.gmra.mrb[0].mxu0 %v1212
        %v1214 = vpop.f32.mrb[0].mxu0
        %v1215 = vadd.f32 %v1118, %v1214
        %v1216 = vpop.f32.mrb[0].mxu0
        %1217 = vdwg.mxu0
        %1218 = vmatprep.subr.mxu0 0.0
        %v1219 = vand.u32 %v1007, 4294901760
        %v1220 = vsub.f32 %v1007, %v1219
        %1221 = vmatpush1.msra.mxu0 %v1220
        %1222 = vmatprep.subr.mxu0 0.0
        %v1223 = vand.u32 %v1008, 4294901760
        %v1224 = vsub.f32 %v1008, %v1223
        %1225 = vmatpush1.msra.mxu0 %v1224
        %1226 = vmatprep.subr.mxu0 0.0
        %v1227 = vand.u32 %v1009, 4294901760
        %v1228 = vsub.f32 %v1009, %v1227
        %1229 = vmatpush1.msra.mxu0 %v1228
        %1230 = vmatprep.subr.mxu0 0.0
        %v1231 = vand.u32 %v1010, 4294901760
        %v1232 = vsub.f32 %v1010, %v1231
        %1233 = vmatpush1.msra.mxu0 %v1232
        %1234 = vmatprep.subr.mxu0 0.0
        %1235 = vmatpush1.msra.mxu0 0.0
        %1236 = vmatprep.subr.mxu0 0.0
        %1237 = vmatpush1.msra.mxu0 0.0
        %1238 = vmatprep.subr.mxu0 0.0
        %1239 = vmatpush1.msra.mxu0 0.0
        %1240 = vmatprep.subr.mxu0 0.0
        %1241 = vmatpush1.msra.mxu0 0.0
        %1242 = vmatprep.subr.mxu0 0.0
        %1243 = vmatpush1.msra.mxu0 0.0
        %1244 = vmatprep.subr.mxu0 0.0
        %1245 = vmatpush1.msra.mxu0 0.0
        %1246 = vmatprep.subr.mxu0 0.0
        %1247 = vmatpush1.msra.mxu0 0.0
        %1248 = vmatprep.subr.mxu0 0.0
        %1249 = vmatpush1.msra.mxu0 0.0
        %1250 = vmatprep.subr.mxu0 0.0
        %1251 = vmatpush1.msra.mxu0 0.0
        %1252 = vmatprep.subr.mxu0 0.0
        %1253 = vmatpush1.msra.mxu0 0.0
        %1254 = vmatprep.subr.mxu0 0.0
        %1255 = vmatpush1.msra.mxu0 0.0
        %1256 = vmatprep.subr.mxu0 0.0
        %1257 = vmatpush1.msra.mxu0 0.0
        %1258 = vmatprep.subr.mxu0 0.0
        %1259 = vmatpush1.msra.mxu0 0.0
        %1260 = vmatprep.subr.mxu0 0.0
        %1261 = vmatpush1.msra.mxu0 0.0
        %1262 = vmatprep.subr.mxu0 0.0
        %1263 = vmatpush1.msra.mxu0 0.0
        %1264 = vmatprep.subr.mxu0 0.0
        %1265 = vmatpush1.msra.mxu0 0.0
        %1266 = vmatprep.subr.mxu0 0.0
        %1267 = vmatpush1.msra.mxu0 0.0
        %1268 = vmatprep.subr.mxu0 0.0
        %1269 = vmatpush1.msra.mxu0 0.0
        %1270 = vmatprep.subr.mxu0 0.0
        %1271 = vmatpush1.msra.mxu0 0.0
        %1272 = vmatprep.subr.mxu0 0.0
        %1273 = vmatpush1.msra.mxu0 0.0
        %1274 = vmatprep.subr.mxu0 0.0
        %1275 = vmatpush1.msra.mxu0 0.0
        %1276 = vmatprep.subr.mxu0 0.0
        %1277 = vmatpush1.msra.mxu0 0.0
        %1278 = vmatprep.subr.mxu0 0.0
        %1279 = vmatpush1.msra.mxu0 0.0
        %1280 = vmatprep.subr.mxu0 0.0
        %1281 = vmatpush1.msra.mxu0 0.0
        %1282 = vmatprep.subr.mxu0 0.0
        %1283 = vmatpush1.msra.mxu0 0.0
        %1284 = vmatprep.subr.mxu0 0.0
        %1285 = vmatpush1.msra.mxu0 0.0
        %1286 = vmatprep.subr.mxu0 0.0
        %1287 = vmatpush1.msra.mxu0 0.0
        %1288 = vmatprep.subr.mxu0 0.0
        %1289 = vmatpush1.msra.mxu0 0.0
        %1290 = vmatprep.mubr.f32.mxu0 0.0
        %v1291 = vand.u32 %v1027, 4294901760
        %v1292 = vsub.f32 %v1027, %v1291
        %1293 = vmatmul.mubr.f32.gmra.mrb[0].mxu0 %v1292
        %v1294 = vpop.f32.mrb[0].mxu0
        %v1295 = vadd.f32 %v1209, %v1294
        %v1296 = vpop.f32.mrb[0].mxu0
        %1297 = vmatprep.mubr.f32.mxu0 0.0
        %v1298 = vand.u32 %v1030, 4294901760
        %v1299 = vsub.f32 %v1030, %v1298
        %1300 = vmatmul.mubr.f32.gmra.mrb[0].mxu0 %v1299
        %v1301 = vpop.f32.mrb[0].mxu0
        %v1302 = vadd.f32 %v1215, %v1301
        %v1303 = vpop.f32.mrb[0].mxu0
        %1304 = vdwg.mxu0
        %1305 = vmatprep.subr.mxu0 0.0
        %v1306 = vand.u32 %v1007, 4294901760
        %1307 = vmatpush1.msra.mxu0 %v1306
        %1308 = vmatprep.subr.mxu0 0.0
        %v1309 = vand.u32 %v1008, 4294901760
        %1310 = vmatpush1.msra.mxu0 %v1309
        %1311 = vmatprep.subr.mxu0 0.0
        %v1312 = vand.u32 %v1009, 4294901760
        %1313 = vmatpush1.msra.mxu0 %v1312
        %1314 = vmatprep.subr.mxu0 0.0
        %v1315 = vand.u32 %v1010, 4294901760
        %1316 = vmatpush1.msra.mxu0 %v1315
        %1317 = vmatprep.subr.mxu0 0.0
        %1318 = vmatpush1.msra.mxu0 0.0
        %1319 = vmatprep.subr.mxu0 0.0
        %1320 = vmatpush1.msra.mxu0 0.0
        %1321 = vmatprep.subr.mxu0 0.0
        %1322 = vmatpush1.msra.mxu0 0.0
        %1323 = vmatprep.subr.mxu0 0.0
        %1324 = vmatpush1.msra.mxu0 0.0
        %1325 = vmatprep.subr.mxu0 0.0
        %1326 = vmatpush1.msra.mxu0 0.0
        %1327 = vmatprep.subr.mxu0 0.0
        %1328 = vmatpush1.msra.mxu0 0.0
        %1329 = vmatprep.subr.mxu0 0.0
        %1330 = vmatpush1.msra.mxu0 0.0
        %1331 = vmatprep.subr.mxu0 0.0
        %1332 = vmatpush1.msra.mxu0 0.0
        %1333 = vmatprep.subr.mxu0 0.0
        %1334 = vmatpush1.msra.mxu0 0.0
        %1335 = vmatprep.subr.mxu0 0.0
        %1336 = vmatpush1.msra.mxu0 0.0
        %1337 = vmatprep.subr.mxu0 0.0
        %1338 = vmatpush1.msra.mxu0 0.0
        %1339 = vmatprep.subr.mxu0 0.0
        %1340 = vmatpush1.msra.mxu0 0.0
        %1341 = vmatprep.subr.mxu0 0.0
        %1342 = vmatpush1.msra.mxu0 0.0
        %1343 = vmatprep.subr.mxu0 0.0
        %1344 = vmatpush1.msra.mxu0 0.0
        %1345 = vmatprep.subr.mxu0 0.0
        %1346 = vmatpush1.msra.mxu0 0.0
        %1347 = vmatprep.subr.mxu0 0.0
        %1348 = vmatpush1.msra.mxu0 0.0
        %1349 = vmatprep.subr.mxu0 0.0
        %1350 = vmatpush1.msra.mxu0 0.0
        %1351 = vmatprep.subr.mxu0 0.0
        %1352 = vmatpush1.msra.mxu0 0.0
        %1353 = vmatprep.subr.mxu0 0.0
        %1354 = vmatpush1.msra.mxu0 0.0
        %1355 = vmatprep.subr.mxu0 0.0
        %1356 = vmatpush1.msra.mxu0 0.0
        %1357 = vmatprep.subr.mxu0 0.0
        %1358 = vmatpush1.msra.mxu0 0.0
        %1359 = vmatprep.subr.mxu0 0.0
        %1360 = vmatpush1.msra.mxu0 0.0
        %1361 = vmatprep.subr.mxu0 0.0
        %1362 = vmatpush1.msra.mxu0 0.0
        %1363 = vmatprep.subr.mxu0 0.0
        %1364 = vmatpush1.msra.mxu0 0.0
        %1365 = vmatprep.subr.mxu0 0.0
        %1366 = vmatpush1.msra.mxu0 0.0
        %1367 = vmatprep.subr.mxu0 0.0
        %1368 = vmatpush1.msra.mxu0 0.0
        %1369 = vmatprep.subr.mxu0 0.0
        %1370 = vmatpush1.msra.mxu0 0.0
        %1371 = vmatprep.subr.mxu0 0.0
        %1372 = vmatpush1.msra.mxu0 0.0
        %1373 = vmatprep.mubr.f32.mxu0 0.0
        %v1374 = vand.u32 %v1027, 4294901760
        %v1375 = vsub.f32 %v1027, %v1374
        %v1376 = vand.u32 %v1375, 4294901760
        %1377 = vmatmul.mubr.f32.gmra.mrb[0].mxu0 %v1376
        %v1378 = vpop.f32.mrb[0].mxu0
        %v1379 = vadd.f32 %v1295, %v1378
        %v1380 = vpop.f32.mrb[0].mxu0
        %1381 = vmatprep.mubr.f32.mxu0 0.0
        %v1382 = vand.u32 %v1030, 4294901760
        %v1383 = vsub.f32 %v1030, %v1382
        %v1384 = vand.u32 %v1383, 4294901760
        %1385 = vmatmul.mubr.f32.gmra.mrb[0].mxu0 %v1384
        %v1386 = vpop.f32.mrb[0].mxu0
        %v1387 = vadd.f32 %v1302, %v1386
        %v1388 = vpop.f32.mrb[0].mxu0
        %1389 = vdwg.mxu0
        %1390 = vmatprep.subr.mxu0 0.0
        %v1391 = vand.u32 %v1007, 4294901760
        %v1392 = vsub.f32 %v1007, %v1391
        %v1393 = vand.u32 %v1392, 4294901760
        %1394 = vmatpush1.msra.mxu0 %v1393
        %1395 = vmatprep.subr.mxu0 0.0
        %v1396 = vand.u32 %v1008, 4294901760
        %v1397 = vsub.f32 %v1008, %v1396
        %v1398 = vand.u32 %v1397, 4294901760
        %1399 = vmatpush1.msra.mxu0 %v1398
        %1400 = vmatprep.subr.mxu0 0.0
        %v1401 = vand.u32 %v1009, 4294901760
        %v1402 = vsub.f32 %v1009, %v1401
        %v1403 = vand.u32 %v1402, 4294901760
        %1404 = vmatpush1.msra.mxu0 %v1403
        %1405 = vmatprep.subr.mxu0 0.0
        %v1406 = vand.u32 %v1010, 4294901760
        %v1407 = vsub.f32 %v1010, %v1406
        %v1408 = vand.u32 %v1407, 4294901760
        %1409 = vmatpush1.msra.mxu0 %v1408
        %1410 = vmatprep.subr.mxu0 0.0
        %1411 = vmatpush1.msra.mxu0 0.0
        %1412 = vmatprep.subr.mxu0 0.0
        %1413 = vmatpush1.msra.mxu0 0.0
        %1414 = vmatprep.subr.mxu0 0.0
        %1415 = vmatpush1.msra.mxu0 0.0
        %1416 = vmatprep.subr.mxu0 0.0
        %1417 = vmatpush1.msra.mxu0 0.0
        %1418 = vmatprep.subr.mxu0 0.0
        %1419 = vmatpush1.msra.mxu0 0.0
        %1420 = vmatprep.subr.mxu0 0.0
        %1421 = vmatpush1.msra.mxu0 0.0
        %1422 = vmatprep.subr.mxu0 0.0
        %1423 = vmatpush1.msra.mxu0 0.0
        %1424 = vmatprep.subr.mxu0 0.0
        %1425 = vmatpush1.msra.mxu0 0.0
        %1426 = vmatprep.subr.mxu0 0.0
        %1427 = vmatpush1.msra.mxu0 0.0
        %1428 = vmatprep.subr.mxu0 0.0
        %1429 = vmatpush1.msra.mxu0 0.0
        %1430 = vmatprep.subr.mxu0 0.0
        %1431 = vmatpush1.msra.mxu0 0.0
        %1432 = vmatprep.subr.mxu0 0.0
        %1433 = vmatpush1.msra.mxu0 0.0
        %1434 = vmatprep.subr.mxu0 0.0
        %1435 = vmatpush1.msra.mxu0 0.0
        %1436 = vmatprep.subr.mxu0 0.0
        %1437 = vmatpush1.msra.mxu0 0.0
        %1438 = vmatprep.subr.mxu0 0.0
        %1439 = vmatpush1.msra.mxu0 0.0
        %1440 = vmatprep.subr.mxu0 0.0
        %1441 = vmatpush1.msra.mxu0 0.0
        %1442 = vmatprep.subr.mxu0 0.0
        %1443 = vmatpush1.msra.mxu0 0.0
        %1444 = vmatprep.subr.mxu0 0.0
        %1445 = vmatpush1.msra.mxu0 0.0
        %1446 = vmatprep.subr.mxu0 0.0
        %1447 = vmatpush1.msra.mxu0 0.0
        %1448 = vmatprep.subr.mxu0 0.0
        %1449 = vmatpush1.msra.mxu0 0.0
        %1450 = vmatprep.subr.mxu0 0.0
        %1451 = vmatpush1.msra.mxu0 0.0
        %1452 = vmatprep.subr.mxu0 0.0
        %1453 = vmatpush1.msra.mxu0 0.0
        %1454 = vmatprep.subr.mxu0 0.0
        %1455 = vmatpush1.msra.mxu0 0.0
        %1456 = vmatprep.subr.mxu0 0.0
        %1457 = vmatpush1.msra.mxu0 0.0
        %1458 = vmatprep.subr.mxu0 0.0
        %1459 = vmatpush1.msra.mxu0 0.0
        %1460 = vmatprep.subr.mxu0 0.0
        %1461 = vmatpush1.msra.mxu0 0.0
        %1462 = vmatprep.subr.mxu0 0.0
        %1463 = vmatpush1.msra.mxu0 0.0
        %1464 = vmatprep.subr.mxu0 0.0
        %1465 = vmatpush1.msra.mxu0 0.0
        %1466 = vmatprep.mubr.f32.mxu0 0.0
        %v1467 = vand.u32 %v1027, 4294901760
        %1468 = vmatmul.mubr.f32.gmra.mrb[0].mxu0 %v1467
        %v1469 = vpop.f32.mrb[0].mxu0
        %v1470 = vadd.f32 %v1379, %v1469
        %v1471 = vpop.f32.mrb[0].mxu0
        %1472 = vmatprep.mubr.f32.mxu0 0.0
        %v1473 = vand.u32 %v1030, 4294901760
        %1474 = vmatmul.mubr.f32.gmra.mrb[0].mxu0 %v1473
        %v1475 = vpop.f32.mrb[0].mxu0
        %v1476 = vadd.f32 %v1387, %v1475
        %v1477 = vpop.f32.mrb[0].mxu0
        %1478 = vdwg.mxu0
        %1479 = vmatprep.subr.mxu0 0.0
        %v1480 = vand.u32 %v1007, 4294901760
        %1481 = vmatpush1.msra.mxu0 %v1480
        %1482 = vmatprep.subr.mxu0 0.0
        %v1483 = vand.u32 %v1008, 4294901760
        %1484 = vmatpush1.msra.mxu0 %v1483
        %1485 = vmatprep.subr.mxu0 0.0
        %v1486 = vand.u32 %v1009, 4294901760
        %1487 = vmatpush1.msra.mxu0 %v1486
        %1488 = vmatprep.subr.mxu0 0.0
        %v1489 = vand.u32 %v1010, 4294901760
        %1490 = vmatpush1.msra.mxu0 %v1489
        %1491 = vmatprep.subr.mxu0 0.0
        %1492 = vmatpush1.msra.mxu0 0.0
        %1493 = vmatprep.subr.mxu0 0.0
        %1494 = vmatpush1.msra.mxu0 0.0
        %1495 = vmatprep.subr.mxu0 0.0
        %1496 = vmatpush1.msra.mxu0 0.0
        %1497 = vmatprep.subr.mxu0 0.0
        %1498 = vmatpush1.msra.mxu0 0.0
        %1499 = vmatprep.subr.mxu0 0.0
        %1500 = vmatpush1.msra.mxu0 0.0
        %1501 = vmatprep.subr.mxu0 0.0
        %1502 = vmatpush1.msra.mxu0 0.0
        %1503 = vmatprep.subr.mxu0 0.0
        %1504 = vmatpush1.msra.mxu0 0.0
        %1505 = vmatprep.subr.mxu0 0.0
        %1506 = vmatpush1.msra.mxu0 0.0
        %1507 = vmatprep.subr.mxu0 0.0
        %1508 = vmatpush1.msra.mxu0 0.0
        %1509 = vmatprep.subr.mxu0 0.0
        %1510 = vmatpush1.msra.mxu0 0.0
        %1511 = vmatprep.subr.mxu0 0.0
        %1512 = vmatpush1.msra.mxu0 0.0
        %1513 = vmatprep.subr.mxu0 0.0
        %1514 = vmatpush1.msra.mxu0 0.0
        %1515 = vmatprep.subr.mxu0 0.0
        %1516 = vmatpush1.msra.mxu0 0.0
        %1517 = vmatprep.subr.mxu0 0.0
        %1518 = vmatpush1.msra.mxu0 0.0
        %1519 = vmatprep.subr.mxu0 0.0
        %1520 = vmatpush1.msra.mxu0 0.0
        %1521 = vmatprep.subr.mxu0 0.0
        %1522 = vmatpush1.msra.mxu0 0.0
        %1523 = vmatprep.subr.mxu0 0.0
        %1524 = vmatpush1.msra.mxu0 0.0
        %1525 = vmatprep.subr.mxu0 0.0
        %1526 = vmatpush1.msra.mxu0 0.0
        %1527 = vmatprep.subr.mxu0 0.0
        %1528 = vmatpush1.msra.mxu0 0.0
        %1529 = vmatprep.subr.mxu0 0.0
        %1530 = vmatpush1.msra.mxu0 0.0
        %1531 = vmatprep.subr.mxu0 0.0
        %1532 = vmatpush1.msra.mxu0 0.0
        %1533 = vmatprep.subr.mxu0 0.0
        %1534 = vmatpush1.msra.mxu0 0.0
        %1535 = vmatprep.subr.mxu0 0.0
        %1536 = vmatpush1.msra.mxu0 0.0
        %1537 = vmatprep.subr.mxu0 0.0
        %1538 = vmatpush1.msra.mxu0 0.0
        %1539 = vmatprep.subr.mxu0 0.0
        %1540 = vmatpush1.msra.mxu0 0.0
        %1541 = vmatprep.subr.mxu0 0.0
        %1542 = vmatpush1.msra.mxu0 0.0
        %1543 = vmatprep.subr.mxu0 0.0
        %1544 = vmatpush1.msra.mxu0 0.0
        %1545 = vmatprep.subr.mxu0 0.0
        %1546 = vmatpush1.msra.mxu0 0.0
        %1547 = vmatprep.mubr.f32.mxu0 0.0
        %v1548 = vand.u32 %v1027, 4294901760
        %1549 = vmatmul.mubr.f32.gmra.mrb[0].mxu0 %v1548
        %v1550 = vpop.f32.mrb[0].mxu0
        %v1551 = vadd.f32 %v1470, %v1550
        %v1552 = vpop.f32.mrb[0].mxu0
        %1553 = vmatprep.mubr.f32.mxu0 0.0
        %v1554 = vand.u32 %v1030, 4294901760
        %1555 = vmatmul.mubr.f32.gmra.mrb[0].mxu0 %v1554
        %v1556 = vpop.f32.mrb[0].mxu0
        %v1557 = vadd.f32 %v1476, %v1556
        %v1558 = vpop.f32.mrb[0].mxu0
        %1559 = vdwg.mxu0
        %v1560 = vmax.f32 %v1551, 0.0
        %v1561 = vmax.f32 %v1557, 0.0
        %v1562 = vld [vmem:[%s6] sm:$0x3]
        %v1563 = vld [vmem:[%s7] sm:$0x3]
        %1565 = vset.pattern.permute.xlu0 0
        %1566 = vperm.xlu0 %1565, %v1563
        %v1567 = vpop.permute.xlu0 %1566
        %vm1569 = vcmask 130048
        %v1571 = vsel %vm1569, %v1562, 0
        %1573 = vmatprep.subr.mxu0 0.0
        %v1574 = vand.u32 %v1560, 4294901760
        %1575 = vmatpush1.msra.mxu0 %v1574
        %1576 = vmatprep.subr.mxu0 0.0
        %v1577 = vand.u32 %v1561, 4294901760
        %1578 = vmatpush1.msra.mxu0 %v1577
        %1579 = vmatprep.subr.mxu0 0.0
        %1580 = vmatpush1.msra.mxu0 0.0
        %1581 = vmatprep.subr.mxu0 0.0
        %1582 = vmatpush1.msra.mxu0 0.0
        %1583 = vmatprep.subr.mxu0 0.0
        %1584 = vmatpush1.msra.mxu0 0.0
        %1585 = vmatprep.subr.mxu0 0.0
        %1586 = vmatpush1.msra.mxu0 0.0
        %1587 = vmatprep.subr.mxu0 0.0
        %1588 = vmatpush1.msra.mxu0 0.0
        %1589 = vmatprep.subr.mxu0 0.0
        %1590 = vmatpush1.msra.mxu0 0.0
        %1591 = vmatprep.subr.mxu0 0.0
        %1592 = vmatpush1.msra.mxu0 0.0
        %1593 = vmatprep.subr.mxu0 0.0
        %1594 = vmatpush1.msra.mxu0 0.0
        %1595 = vmatprep.subr.mxu0 0.0
        %1596 = vmatpush1.msra.mxu0 0.0
        %1597 = vmatprep.subr.mxu0 0.0
        %1598 = vmatpush1.msra.mxu0 0.0
        %1599 = vmatprep.subr.mxu0 0.0
        %1600 = vmatpush1.msra.mxu0 0.0
        %1601 = vmatprep.subr.mxu0 0.0
        %1602 = vmatpush1.msra.mxu0 0.0
        %1603 = vmatprep.subr.mxu0 0.0
        %1604 = vmatpush1.msra.mxu0 0.0
        %1605 = vmatprep.subr.mxu0 0.0
        %1606 = vmatpush1.msra.mxu0 0.0
        %1607 = vmatprep.subr.mxu0 0.0
        %1608 = vmatpush1.msra.mxu0 0.0
        %1609 = vmatprep.subr.mxu0 0.0
        %1610 = vmatpush1.msra.mxu0 0.0
        %1611 = vmatprep.subr.mxu0 0.0
        %1612 = vmatpush1.msra.mxu0 0.0
        %1613 = vmatprep.subr.mxu0 0.0
        %1614 = vmatpush1.msra.mxu0 0.0
        %1615 = vmatprep.subr.mxu0 0.0
        %1616 = vmatpush1.msra.mxu0 0.0
        %1617 = vmatprep.subr.mxu0 0.0
        %1618 = vmatpush1.msra.mxu0 0.0
        %1619 = vmatprep.subr.mxu0 0.0
        %1620 = vmatpush1.msra.mxu0 0.0
        %1621 = vmatprep.subr.mxu0 0.0
        %1622 = vmatpush1.msra.mxu0 0.0
        %1623 = vmatprep.subr.mxu0 0.0
        %1624 = vmatpush1.msra.mxu0 0.0
        %1625 = vmatprep.subr.mxu0 0.0
        %1626 = vmatpush1.msra.mxu0 0.0
        %1627 = vmatprep.subr.mxu0 0.0
        %1628 = vmatpush1.msra.mxu0 0.0
        %1629 = vmatprep.subr.mxu0 0.0
        %1630 = vmatpush1.msra.mxu0 0.0
        %1631 = vmatprep.subr.mxu0 0.0
        %1632 = vmatpush1.msra.mxu0 0.0
        %1633 = vmatprep.subr.mxu0 0.0
        %1634 = vmatpush1.msra.mxu0 0.0
        %1635 = vmatprep.subr.mxu0 0.0
        %1636 = vmatpush1.msra.mxu0 0.0
        %1637 = vmatprep.subr.mxu0 0.0
        %1638 = vmatpush1.msra.mxu0 0.0
        %1639 = vmatprep.mubr.f32.mxu0 0.0
        %v1640 = vand.u32 %v1571, 4294901760
        %v1641 = vsub.f32 %v1571, %v1640
        %v1642 = vand.u32 %v1641, 4294901760
        %v1643 = vsub.f32 %v1641, %v1642
        %v1644 = vand.u32 %v1643, 4294901760
        %1645 = vmatmul.mubr.f32.gmra.mrb[0].mxu0 %v1644
        %v1646 = vpop.f32.mrb[0].mxu0
        %v1647 = vadd.f32 %v1567, %v1646
        %v1648 = vpop.f32.mrb[0].mxu0
        %1649 = vdwg.mxu0
        %1650 = vmatprep.subr.mxu0 0.0
        %v1651 = vand.u32 %v1560, 4294901760
        %v1652 = vsub.f32 %v1560, %v1651
        %v1653 = vand.u32 %v1652, 4294901760
        %v1654 = vsub.f32 %v1652, %v1653
        %v1655 = vand.u32 %v1654, 4294901760
        %1656 = vmatpush1.msra.mxu0 %v1655
        %1657 = vmatprep.subr.mxu0 0.0
        %v1658 = vand.u32 %v1561, 4294901760
        %v1659 = vsub.f32 %v1561, %v1658
        %v1660 = vand.u32 %v1659, 4294901760
        %v1661 = vsub.f32 %v1659, %v1660
        %v1662 = vand.u32 %v1661, 4294901760
        %1663 = vmatpush1.msra.mxu0 %v1662
        %1664 = vmatprep.subr.mxu0 0.0
        %1665 = vmatpush1.msra.mxu0 0.0
        %1666 = vmatprep.subr.mxu0 0.0
        %1667 = vmatpush1.msra.mxu0 0.0
        %1668 = vmatprep.subr.mxu0 0.0
        %1669 = vmatpush1.msra.mxu0 0.0
        %1670 = vmatprep.subr.mxu0 0.0
        %1671 = vmatpush1.msra.mxu0 0.0
        %1672 = vmatprep.subr.mxu0 0.0
        %1673 = vmatpush1.msra.mxu0 0.0
        %1674 = vmatprep.subr.mxu0 0.0
        %1675 = vmatpush1.msra.mxu0 0.0
        %1676 = vmatprep.subr.mxu0 0.0
        %1677 = vmatpush1.msra.mxu0 0.0
        %1678 = vmatprep.subr.mxu0 0.0
        %1679 = vmatpush1.msra.mxu0 0.0
        %1680 = vmatprep.subr.mxu0 0.0
        %1681 = vmatpush1.msra.mxu0 0.0
        %1682 = vmatprep.subr.mxu0 0.0
        %1683 = vmatpush1.msra.mxu0 0.0
        %1684 = vmatprep.subr.mxu0 0.0
        %1685 = vmatpush1.msra.mxu0 0.0
        %1686 = vmatprep.subr.mxu0 0.0
        %1687 = vmatpush1.msra.mxu0 0.0
        %1688 = vmatprep.subr.mxu0 0.0
        %1689 = vmatpush1.msra.mxu0 0.0
        %1690 = vmatprep.subr.mxu0 0.0
        %1691 = vmatpush1.msra.mxu0 0.0
        %1692 = vmatprep.subr.mxu0 0.0
        %1693 = vmatpush1.msra.mxu0 0.0
        %1694 = vmatprep.subr.mxu0 0.0
        %1695 = vmatpush1.msra.mxu0 0.0
        %1696 = vmatprep.subr.mxu0 0.0
        %1697 = vmatpush1.msra.mxu0 0.0
        %1698 = vmatprep.subr.mxu0 0.0
        %1699 = vmatpush1.msra.mxu0 0.0
        %1700 = vmatprep.subr.mxu0 0.0
        %1701 = vmatpush1.msra.mxu0 0.0
        %1702 = vmatprep.subr.mxu0 0.0
        %1703 = vmatpush1.msra.mxu0 0.0
        %1704 = vmatprep.subr.mxu0 0.0
        %1705 = vmatpush1.msra.mxu0 0.0
        %1706 = vmatprep.subr.mxu0 0.0
        %1707 = vmatpush1.msra.mxu0 0.0
        %1708 = vmatprep.subr.mxu0 0.0
        %1709 = vmatpush1.msra.mxu0 0.0
        %1710 = vmatprep.subr.mxu0 0.0
        %1711 = vmatpush1.msra.mxu0 0.0
        %1712 = vmatprep.subr.mxu0 0.0
        %1713 = vmatpush1.msra.mxu0 0.0
        %1714 = vmatprep.subr.mxu0 0.0
        %1715 = vmatpush1.msra.mxu0 0.0
        %1716 = vmatprep.subr.mxu0 0.0
        %1717 = vmatpush1.msra.mxu0 0.0
        %1718 = vmatprep.subr.mxu0 0.0
        %1719 = vmatpush1.msra.mxu0 0.0
        %1720 = vmatprep.subr.mxu0 0.0
        %1721 = vmatpush1.msra.mxu0 0.0
        %1722 = vmatprep.subr.mxu0 0.0
        %1723 = vmatpush1.msra.mxu0 0.0
        %1724 = vmatprep.mubr.f32.mxu0 0.0
        %v1725 = vand.u32 %v1571, 4294901760
        %1726 = vmatmul.mubr.f32.gmra.mrb[0].mxu0 %v1725
        %v1727 = vpop.f32.mrb[0].mxu0
        %v1728 = vadd.f32 %v1647, %v1727
        %v1729 = vpop.f32.mrb[0].mxu0
        %1730 = vdwg.mxu0
        %1731 = vmatprep.subr.mxu0 0.0
        %v1732 = vand.u32 %v1560, 4294901760
        %v1733 = vsub.f32 %v1560, %v1732
        %1734 = vmatpush1.msra.mxu0 %v1733
        %1735 = vmatprep.subr.mxu0 0.0
        %v1736 = vand.u32 %v1561, 4294901760
        %v1737 = vsub.f32 %v1561, %v1736
        %1738 = vmatpush1.msra.mxu0 %v1737
        %1739 = vmatprep.subr.mxu0 0.0
        %1740 = vmatpush1.msra.mxu0 0.0
        %1741 = vmatprep.subr.mxu0 0.0
        %1742 = vmatpush1.msra.mxu0 0.0
        %1743 = vmatprep.subr.mxu0 0.0
        %1744 = vmatpush1.msra.mxu0 0.0
        %1745 = vmatprep.subr.mxu0 0.0
        %1746 = vmatpush1.msra.mxu0 0.0
        %1747 = vmatprep.subr.mxu0 0.0
        %1748 = vmatpush1.msra.mxu0 0.0
        %1749 = vmatprep.subr.mxu0 0.0
        %1750 = vmatpush1.msra.mxu0 0.0
        %1751 = vmatprep.subr.mxu0 0.0
        %1752 = vmatpush1.msra.mxu0 0.0
        %1753 = vmatprep.subr.mxu0 0.0
        %1754 = vmatpush1.msra.mxu0 0.0
        %1755 = vmatprep.subr.mxu0 0.0
        %1756 = vmatpush1.msra.mxu0 0.0
        %1757 = vmatprep.subr.mxu0 0.0
        %1758 = vmatpush1.msra.mxu0 0.0
        %1759 = vmatprep.subr.mxu0 0.0
        %1760 = vmatpush1.msra.mxu0 0.0
        %1761 = vmatprep.subr.mxu0 0.0
        %1762 = vmatpush1.msra.mxu0 0.0
        %1763 = vmatprep.subr.mxu0 0.0
        %1764 = vmatpush1.msra.mxu0 0.0
        %1765 = vmatprep.subr.mxu0 0.0
        %1766 = vmatpush1.msra.mxu0 0.0
        %1767 = vmatprep.subr.mxu0 0.0
        %1768 = vmatpush1.msra.mxu0 0.0
        %1769 = vmatprep.subr.mxu0 0.0
        %1770 = vmatpush1.msra.mxu0 0.0
        %1771 = vmatprep.subr.mxu0 0.0
        %1772 = vmatpush1.msra.mxu0 0.0
        %1773 = vmatprep.subr.mxu0 0.0
        %1774 = vmatpush1.msra.mxu0 0.0
        %1775 = vmatprep.subr.mxu0 0.0
        %1776 = vmatpush1.msra.mxu0 0.0
        %1777 = vmatprep.subr.mxu0 0.0
        %1778 = vmatpush1.msra.mxu0 0.0
        %1779 = vmatprep.subr.mxu0 0.0
        %1780 = vmatpush1.msra.mxu0 0.0
        %1781 = vmatprep.subr.mxu0 0.0
        %1782 = vmatpush1.msra.mxu0 0.0
        %1783 = vmatprep.subr.mxu0 0.0
        %1784 = vmatpush1.msra.mxu0 0.0
        %1785 = vmatprep.subr.mxu0 0.0
        %1786 = vmatpush1.msra.mxu0 0.0
        %1787 = vmatprep.subr.mxu0 0.0
        %1788 = vmatpush1.msra.mxu0 0.0
        %1789 = vmatprep.subr.mxu0 0.0
        %1790 = vmatpush1.msra.mxu0 0.0
        %1791 = vmatprep.subr.mxu0 0.0
        %1792 = vmatpush1.msra.mxu0 0.0
        %1793 = vmatprep.subr.mxu0 0.0
        %1794 = vmatpush1.msra.mxu0 0.0
        %1795 = vmatprep.subr.mxu0 0.0
        %1796 = vmatpush1.msra.mxu0 0.0
        %1797 = vmatprep.subr.mxu0 0.0
        %1798 = vmatpush1.msra.mxu0 0.0
        %1799 = vmatprep.mubr.f32.mxu0 0.0
        %v1800 = vand.u32 %v1571, 4294901760
        %v1801 = vsub.f32 %v1571, %v1800
        %1802 = vmatmul.mubr.f32.gmra.mrb[0].mxu0 %v1801
        %v1803 = vpop.f32.mrb[0].mxu0
        %v1804 = vadd.f32 %v1728, %v1803
        %v1805 = vpop.f32.mrb[0].mxu0
        %1806 = vdwg.mxu0
        %1807 = vmatprep.subr.mxu0 0.0
        %v1808 = vand.u32 %v1560, 4294901760
        %1809 = vmatpush1.msra.mxu0 %v1808
        %1810 = vmatprep.subr.mxu0 0.0
        %v1811 = vand.u32 %v1561, 4294901760
        %1812 = vmatpush1.msra.mxu0 %v1811
        %1813 = vmatprep.subr.mxu0 0.0
        %1814 = vmatpush1.msra.mxu0 0.0
        %1815 = vmatprep.subr.mxu0 0.0
        %1816 = vmatpush1.msra.mxu0 0.0
        %1817 = vmatprep.subr.mxu0 0.0
        %1818 = vmatpush1.msra.mxu0 0.0
        %1819 = vmatprep.subr.mxu0 0.0
        %1820 = vmatpush1.msra.mxu0 0.0
        %1821 = vmatprep.subr.mxu0 0.0
        %1822 = vmatpush1.msra.mxu0 0.0
        %1823 = vmatprep.subr.mxu0 0.0
        %1824 = vmatpush1.msra.mxu0 0.0
        %1825 = vmatprep.subr.mxu0 0.0
        %1826 = vmatpush1.msra.mxu0 0.0
        %1827 = vmatprep.subr.mxu0 0.0
        %1828 = vmatpush1.msra.mxu0 0.0
        %1829 = vmatprep.subr.mxu0 0.0
        %1830 = vmatpush1.msra.mxu0 0.0
        %1831 = vmatprep.subr.mxu0 0.0
        %1832 = vmatpush1.msra.mxu0 0.0
        %1833 = vmatprep.subr.mxu0 0.0
        %1834 = vmatpush1.msra.mxu0 0.0
        %1835 = vmatprep.subr.mxu0 0.0
        %1836 = vmatpush1.msra.mxu0 0.0
        %1837 = vmatprep.subr.mxu0 0.0
        %1838 = vmatpush1.msra.mxu0 0.0
        %1839 = vmatprep.subr.mxu0 0.0
        %1840 = vmatpush1.msra.mxu0 0.0
        %1841 = vmatprep.subr.mxu0 0.0
        %1842 = vmatpush1.msra.mxu0 0.0
        %1843 = vmatprep.subr.mxu0 0.0
        %1844 = vmatpush1.msra.mxu0 0.0
        %1845 = vmatprep.subr.mxu0 0.0
        %1846 = vmatpush1.msra.mxu0 0.0
        %1847 = vmatprep.subr.mxu0 0.0
        %1848 = vmatpush1.msra.mxu0 0.0
        %1849 = vmatprep.subr.mxu0 0.0
        %1850 = vmatpush1.msra.mxu0 0.0
        %1851 = vmatprep.subr.mxu0 0.0
        %1852 = vmatpush1.msra.mxu0 0.0
        %1853 = vmatprep.subr.mxu0 0.0
        %1854 = vmatpush1.msra.mxu0 0.0
        %1855 = vmatprep.subr.mxu0 0.0
        %1856 = vmatpush1.msra.mxu0 0.0
        %1857 = vmatprep.subr.mxu0 0.0
        %1858 = vmatpush1.msra.mxu0 0.0
        %1859 = vmatprep.subr.mxu0 0.0
        %1860 = vmatpush1.msra.mxu0 0.0
        %1861 = vmatprep.subr.mxu0 0.0
        %1862 = vmatpush1.msra.mxu0 0.0
        %1863 = vmatprep.subr.mxu0 0.0
        %1864 = vmatpush1.msra.mxu0 0.0
        %1865 = vmatprep.subr.mxu0 0.0
        %1866 = vmatpush1.msra.mxu0 0.0
        %1867 = vmatprep.subr.mxu0 0.0
        %1868 = vmatpush1.msra.mxu0 0.0
        %1869 = vmatprep.subr.mxu0 0.0
        %1870 = vmatpush1.msra.mxu0 0.0
        %1871 = vmatprep.subr.mxu0 0.0
        %1872 = vmatpush1.msra.mxu0 0.0
        %1873 = vmatprep.mubr.f32.mxu0 0.0
        %v1874 = vand.u32 %v1571, 4294901760
        %v1875 = vsub.f32 %v1571, %v1874
        %v1876 = vand.u32 %v1875, 4294901760
        %1877 = vmatmul.mubr.f32.gmra.mrb[0].mxu0 %v1876
        %v1878 = vpop.f32.mrb[0].mxu0
        %v1879 = vadd.f32 %v1804, %v1878
        %v1880 = vpop.f32.mrb[0].mxu0
        %1881 = vdwg.mxu0
        %1882 = vmatprep.subr.mxu0 0.0
        %v1883 = vand.u32 %v1560, 4294901760
        %v1884 = vsub.f32 %v1560, %v1883
        %v1885 = vand.u32 %v1884, 4294901760
        %1886 = vmatpush1.msra.mxu0 %v1885
        %1887 = vmatprep.subr.mxu0 0.0
        %v1888 = vand.u32 %v1561, 4294901760
        %v1889 = vsub.f32 %v1561, %v1888
        %v1890 = vand.u32 %v1889, 4294901760
        %1891 = vmatpush1.msra.mxu0 %v1890
        %1892 = vmatprep.subr.mxu0 0.0
        %1893 = vmatpush1.msra.mxu0 0.0
        %1894 = vmatprep.subr.mxu0 0.0
        %1895 = vmatpush1.msra.mxu0 0.0
        %1896 = vmatprep.subr.mxu0 0.0
        %1897 = vmatpush1.msra.mxu0 0.0
        %1898 = vmatprep.subr.mxu0 0.0
        %1899 = vmatpush1.msra.mxu0 0.0
        %1900 = vmatprep.subr.mxu0 0.0
        %1901 = vmatpush1.msra.mxu0 0.0
        %1902 = vmatprep.subr.mxu0 0.0
        %1903 = vmatpush1.msra.mxu0 0.0
        %1904 = vmatprep.subr.mxu0 0.0
        %1905 = vmatpush1.msra.mxu0 0.0
        %1906 = vmatprep.subr.mxu0 0.0
        %1907 = vmatpush1.msra.mxu0 0.0
        %1908 = vmatprep.subr.mxu0 0.0
        %1909 = vmatpush1.msra.mxu0 0.0
        %1910 = vmatprep.subr.mxu0 0.0
        %1911 = vmatpush1.msra.mxu0 0.0
        %1912 = vmatprep.subr.mxu0 0.0
        %1913 = vmatpush1.msra.mxu0 0.0
        %1914 = vmatprep.subr.mxu0 0.0
        %1915 = vmatpush1.msra.mxu0 0.0
        %1916 = vmatprep.subr.mxu0 0.0
        %1917 = vmatpush1.msra.mxu0 0.0
        %1918 = vmatprep.subr.mxu0 0.0
        %1919 = vmatpush1.msra.mxu0 0.0
        %1920 = vmatprep.subr.mxu0 0.0
        %1921 = vmatpush1.msra.mxu0 0.0
        %1922 = vmatprep.subr.mxu0 0.0
        %1923 = vmatpush1.msra.mxu0 0.0
        %1924 = vmatprep.subr.mxu0 0.0
        %1925 = vmatpush1.msra.mxu0 0.0
        %1926 = vmatprep.subr.mxu0 0.0
        %1927 = vmatpush1.msra.mxu0 0.0
        %1928 = vmatprep.subr.mxu0 0.0
        %1929 = vmatpush1.msra.mxu0 0.0
        %1930 = vmatprep.subr.mxu0 0.0
        %1931 = vmatpush1.msra.mxu0 0.0
        %1932 = vmatprep.subr.mxu0 0.0
        %1933 = vmatpush1.msra.mxu0 0.0
        %1934 = vmatprep.subr.mxu0 0.0
        %1935 = vmatpush1.msra.mxu0 0.0
        %1936 = vmatprep.subr.mxu0 0.0
        %1937 = vmatpush1.msra.mxu0 0.0
        %1938 = vmatprep.subr.mxu0 0.0
        %1939 = vmatpush1.msra.mxu0 0.0
        %1940 = vmatprep.subr.mxu0 0.0
        %1941 = vmatpush1.msra.mxu0 0.0
        %1942 = vmatprep.subr.mxu0 0.0
        %1943 = vmatpush1.msra.mxu0 0.0
        %1944 = vmatprep.subr.mxu0 0.0
        %1945 = vmatpush1.msra.mxu0 0.0
        %1946 = vmatprep.subr.mxu0 0.0
        %1947 = vmatpush1.msra.mxu0 0.0
        %1948 = vmatprep.subr.mxu0 0.0
        %1949 = vmatpush1.msra.mxu0 0.0
        %1950 = vmatprep.subr.mxu0 0.0
        %1951 = vmatpush1.msra.mxu0 0.0
        %1952 = vmatprep.mubr.f32.mxu0 0.0
        %v1953 = vand.u32 %v1571, 4294901760
        %1954 = vmatmul.mubr.f32.gmra.mrb[0].mxu0 %v1953
        %v1955 = vpop.f32.mrb[0].mxu0
        %v1956 = vadd.f32 %v1879, %v1955
        %v1957 = vpop.f32.mrb[0].mxu0
        %1958 = vdwg.mxu0
        %1959 = vmatprep.subr.mxu0 0.0
        %v1960 = vand.u32 %v1560, 4294901760
        %1961 = vmatpush1.msra.mxu0 %v1960
        %1962 = vmatprep.subr.mxu0 0.0
        %v1963 = vand.u32 %v1561, 4294901760
        %1964 = vmatpush1.msra.mxu0 %v1963
        %1965 = vmatprep.subr.mxu0 0.0
        %1966 = vmatpush1.msra.mxu0 0.0
        %1967 = vmatprep.subr.mxu0 0.0
        %1968 = vmatpush1.msra.mxu0 0.0
        %1969 = vmatprep.subr.mxu0 0.0
        %1970 = vmatpush1.msra.mxu0 0.0
        %1971 = vmatprep.subr.mxu0 0.0
        %1972 = vmatpush1.msra.mxu0 0.0
        %1973 = vmatprep.subr.mxu0 0.0
        %1974 = vmatpush1.msra.mxu0 0.0
        %1975 = vmatprep.subr.mxu0 0.0
        %1976 = vmatpush1.msra.mxu0 0.0
        %1977 = vmatprep.subr.mxu0 0.0
        %1978 = vmatpush1.msra.mxu0 0.0
        %1979 = vmatprep.subr.mxu0 0.0
        %1980 = vmatpush1.msra.mxu0 0.0
        %1981 = vmatprep.subr.mxu0 0.0
        %1982 = vmatpush1.msra.mxu0 0.0
        %1983 = vmatprep.subr.mxu0 0.0
        %1984 = vmatpush1.msra.mxu0 0.0
        %1985 = vmatprep.subr.mxu0 0.0
        %1986 = vmatpush1.msra.mxu0 0.0
        %1987 = vmatprep.subr.mxu0 0.0
        %1988 = vmatpush1.msra.mxu0 0.0
        %1989 = vmatprep.subr.mxu0 0.0
        %1990 = vmatpush1.msra.mxu0 0.0
        %1991 = vmatprep.subr.mxu0 0.0
        %1992 = vmatpush1.msra.mxu0 0.0
        %1993 = vmatprep.subr.mxu0 0.0
        %1994 = vmatpush1.msra.mxu0 0.0
        %1995 = vmatprep.subr.mxu0 0.0
        %1996 = vmatpush1.msra.mxu0 0.0
        %1997 = vmatprep.subr.mxu0 0.0
        %1998 = vmatpush1.msra.mxu0 0.0
        %1999 = vmatprep.subr.mxu0 0.0
        %2000 = vmatpush1.msra.mxu0 0.0
        %2001 = vmatprep.subr.mxu0 0.0
        %2002 = vmatpush1.msra.mxu0 0.0
        %2003 = vmatprep.subr.mxu0 0.0
        %2004 = vmatpush1.msra.mxu0 0.0
        %2005 = vmatprep.subr.mxu0 0.0
        %2006 = vmatpush1.msra.mxu0 0.0
        %2007 = vmatprep.subr.mxu0 0.0
        %2008 = vmatpush1.msra.mxu0 0.0
        %2009 = vmatprep.subr.mxu0 0.0
        %2010 = vmatpush1.msra.mxu0 0.0
        %2011 = vmatprep.subr.mxu0 0.0
        %2012 = vmatpush1.msra.mxu0 0.0
        %2013 = vmatprep.subr.mxu0 0.0
        %2014 = vmatpush1.msra.mxu0 0.0
        %2015 = vmatprep.subr.mxu0 0.0
        %2016 = vmatpush1.msra.mxu0 0.0
        %2017 = vmatprep.subr.mxu0 0.0
        %2018 = vmatpush1.msra.mxu0 0.0
        %2019 = vmatprep.subr.mxu0 0.0
        %2020 = vmatpush1.msra.mxu0 0.0
        %2021 = vmatprep.subr.mxu0 0.0
        %2022 = vmatpush1.msra.mxu0 0.0
        %2023 = vmatprep.subr.mxu0 0.0
        %2024 = vmatpush1.msra.mxu0 0.0
        %2025 = vmatprep.mubr.f32.mxu0 0.0
        %v2026 = vand.u32 %v1571, 4294901760
        %2027 = vmatmul.mubr.f32.gmra.mrb[0].mxu0 %v2026
        %v2028 = vpop.f32.mrb[0].mxu0
        %v2029 = vadd.f32 %v1956, %v2028
        %v2030 = vpop.f32.mrb[0].mxu0
        %2031 = vdwg.mxu0
        %2032 = vst [vmem:[%s344] sm:$0x3] %v2029
        %s2033 = sand.u32 %s228, 1
        %s2034 = scalar_lea.sflag [#allocation3], %s2033
        %s2035 = sand.u32 %s228, 1
        %s2036 = smul.addr %s2035, 2
        %s2037 = scalar_lea.vmem [#allocation2], %s2036
        // Predicated region
        $region53: #{tpu_custom_call.1} parent=51 // pred_check
          %p2038 = pneg %p238
        $region54: #{tpu_custom_call.1} parent=51 // pred_check_branch
          %2040 = sbr.rel (%p2038) target = $region56
        $region55: #{tpu_custom_call.1} parent=51 // pred_region
          %s2042 = ssub.s32 32, 32
          %2043 = vsyncadd %s2034, %s2042
          %s2044 = sadd.s32 %s27, %s26
          %s2045 = smul.addr %s2044, 32
          %s2046 = scalar_lea.hbm %s8, %s2045
          %s2048 = sshll.u32 %s2037, 4
          %s2049 = int_to_ptr.vmem [resolvable:$true] %s2048
          %2051 = dma.vmem_to_hbm [thread:$0]  %s2049, 32, %s2046, %s2034
        $region56: #{tpu_custom_call.1} parent=51 // pred_fallthru
          _
      $region52: #{tpu_custom_call.1} parent=5 // pred_fallthru
        _
      %p2052 = scmp.le.s32.totalorder 2, %s17
      // Predicated region
      $region57: #{tpu_custom_call.1} parent=5 // pred_check
        %p2053 = pneg %p2052
      $region58: #{tpu_custom_call.1} parent=5 // pred_check_branch
        %2055 = sbr.rel (%p2053) target = $region60
      $region59: #{tpu_custom_call.1} parent=5 // pred_region
        %s2056 = ssub.s32 %s17, 2
        // Predicated region
        $region61: #{tpu_custom_call.1} parent=59 // pred_check
          %p2057 = pneg %p244
        $region62: #{tpu_custom_call.1} parent=59 // pred_check_branch
          %2059 = sbr.rel (%p2057) target = $region64
        $region63: #{tpu_custom_call.1} parent=59 // pred_region
          %s2060 = sand.u32 %s229, 1
          %s2061 = scalar_lea.sflag [#allocation3], %s2060
          %s2062 = sand.u32 %s229, 1
          %s2063 = smul.addr %s2062, 2
          %s2064 = scalar_lea.vmem [#allocation2], %s2063
          %2065 = dma.done %s2061, 32
        $region64: #{tpu_custom_call.1} parent=59 // pred_fallthru
          _
      $region60: #{tpu_custom_call.1} parent=5 // pred_fallthru
        _
    $region6: #{tpu_custom_call.1} parent=1 // loop_footer
      %s21 = sadd.s32 1, %s17
    $region7: #{tpu_custom_call.1} parent=1 // loop_footer_branch
      %16 = sbr.rel target = $region3
    $region8: #{tpu_custom_call.1} parent=1 // loop_exit
      _
    %2066 = vsyncpa [#allocation3], 1
    %s2067 = scalar_lea.sflag [#allocation3], 1
    %2068 = vsyncpa %s2067, 1

</llo_original>
